<compile_context>
chip_gen: v7x
topology: tpu7x:2x2x1
jax: 0.10.0
libtpu: 0.0.40
codegen_flags: <defaults>
</compile_context>

<pallas_src>
import functools

import jax
import jax.numpy as jnp
from jax.experimental import pallas as pl
from jax.experimental.pallas import tpu as pltpu

_VMEM = pl.BlockSpec(memory_space=pltpu.MemorySpace.VMEM)


# --------------------------------------------------------------------------
# Pallas kernels
# --------------------------------------------------------------------------
def _bigru_kernel(gx_f_ref, gx_b_ref, whh_f_ref, whh_b_ref, ghb_f_ref, ghb_b_ref,
                  out_ref):
    """Interleaved bidirectional GRU recurrence (PyTorch gate order r, z, n).

    gx_*_ref : [B, T, 3H] f32  -- precomputed W_ih x + b_ih (+ b_hh for r, z gates)
    whh_*    : [H, 3H]    bf16 -- fused recurrent weights  [W_hr | W_hz | W_hn]
    ghb_*    : [1, 3H]    f32  -- [0 | 0 | b_hn]  (only the n-gate hidden bias)
    out_ref  : [B, T, 2H] f32  -- forward hidden in [..., :H], backward in [..., H:]
    """
    B, T, _ = gx_f_ref.shape
    H = whh_f_ref.shape[0]

    gx_f = gx_f_ref[...]
    gx_b = gx_b_ref[...]
    whh_f = whh_f_ref[...]
    whh_b = whh_b_ref[...]
    ghb_f = ghb_f_ref[...]
    ghb_b = ghb_b_ref[...]

    def gru_step(gx, h, whh, ghb):
        # single fused [B,H] x [H,3H] bf16 matmul, f32 accumulation
        gh = jnp.dot(h.astype(jnp.bfloat16), whh,
                     preferred_element_type=jnp.float32) + ghb
        r = jax.nn.sigmoid(gx[:, 0:H] + gh[:, 0:H])
        z = jax.nn.sigmoid(gx[:, H:2 * H] + gh[:, H:2 * H])
        n = jnp.tanh(gx[:, 2 * H:3 * H] + r * gh[:, 2 * H:3 * H])
        return (1.0 - z) * n + z * h

    h_f = jnp.zeros((B, H), jnp.float32)
    h_b = jnp.zeros((B, H), jnp.float32)

    # Fully unrolled static time loop (T small & static): the two independent
    # direction chains are interleaved so the scheduler can hide the MXU/EUP
    # latency of one direction under the other.  Hidden states live in vregs.
    for i in range(T):
        t_b = T - 1 - i
        h_f = gru_step(gx_f[:, i, :], h_f, whh_f, ghb_f)
        h_b = gru_step(gx_b[:, t_b, :], h_b, whh_b, ghb_b)
        out_ref[:, i, 0:H] = h_f
        out_ref[:, t_b, H:2 * H] = h_b


def _heads_kernel(x_ref, w_ref, b_ref, o_ref, *, num_classes, with_trans):
    """Fused prediction heads.

    x_ref : [N, 2H] f32 (cast to bf16 for the MXU in-kernel)
    w_ref : [2H, W] bf16, columns = [fc_0..fc_L | row_0..row_{L-1} | col_0..col_{L-1}]
    b_ref : [1, W] f32
    o_ref : [N, sum(num_classes)] f32, packed per-level results
    """
    nc = tuple(num_classes)
    levels = len(nc) - 1

    x = x_ref[...].astype(jnp.bfloat16)
    y = jnp.dot(x, w_ref[...], preferred_element_type=jnp.float32) + b_ref[...]

    off = 0
    fc = []
    for c in nc:
        fc.append(y[:, off:off + c]); off += c
    row = []
    for c in nc[1:]:
        row.append(y[:, off:off + c]); off += c
    col = []
    for c in nc[:-1]:
        col.append(y[:, off:off + c]); off += c

    out = [fc[0]]
    for i in range(levels):
        res = fc[i + 1]
        if with_trans:
            # einsum('btrc,btc->btr', row x col, fc[i]) == row * sum(col * fc[i])
            res = res + row[i] * jnp.sum(col[i] * fc[i], axis=-1, keepdims=True)
        out.append(res)

    off = 0
    for i, c in enumerate(nc):
        o_ref[:, off:off + c] = out[i]
        off += c


# --------------------------------------------------------------------------
# Wrappers
# --------------------------------------------------------------------------
def _prep_direction(x_bf16, wih, whh, bih, bhh):
    """Fuse gate weights, fold biases, and hoist the input projection."""
    wih3 = jnp.concatenate([wih[0], wih[1], wih[2]], axis=-1).astype(jnp.bfloat16)  # [F,3H]
    whh3 = jnp.concatenate([whh[0], whh[1], whh[2]], axis=-1).astype(jnp.bfloat16)  # [H,3H]
    # r/z gates: both biases fold into gx; n gate: b_hn must stay inside r*(...)
    gxb = jnp.concatenate([bih[0] + bhh[0], bih[1] + bhh[1], bih[2]], axis=-1)      # [1,3H]
    ghb = jnp.concatenate([jnp.zeros_like(bhh[0]), jnp.zeros_like(bhh[1]), bhh[2]],
                          axis=-1)                                                  # [1,3H]
    gx = jnp.einsum('btf,fg->btg', x_bf16, wih3,
                    preferred_element_type=jnp.float32) + gxb                       # [B,T,3H]
    return gx, whh3, ghb


def gru_bidir(feature, g):
    """Bidirectional single-layer GRU -> [B, T, 2H] (fwd | bwd)."""
    B, T, _ = feature.shape
    H = g["wih_f"].shape[-1]
    x_bf16 = feature.astype(jnp.bfloat16)

    gx_f, whh_f3, ghb_f = _prep_direction(x_bf16, g["wih_f"], g["whh_f"],
                                          g["bih_f"], g["bhh_f"])
    gx_b, whh_b3, ghb_b = _prep_direction(x_bf16, g["wih_b"], g["whh_b"],
                                          g["bih_b"], g["bhh_b"])

    return pl.pallas_call(
        _bigru_kernel,
        out_shape=jax.ShapeDtypeStruct((B, T, 2 * H), jnp.float32),
        in_specs=[_VMEM] * 6,
        out_specs=_VMEM,
    )(gx_f, gx_b, whh_f3, whh_b3, ghb_f, ghb_b)


def _fused_heads(flat, params, num_classes, with_trans):
    w_parts = ([w for (w, _) in params["fc"]]
               + [w for (w, _) in params["row"]]
               + [w for (w, _) in params["col"]])
    b_parts = ([b for (_, b) in params["fc"]]
               + [b for (_, b) in params["row"]]
               + [b for (_, b) in params["col"]])
    w_all = jnp.concatenate(w_parts, axis=-1).astype(jnp.bfloat16)  # [2H, W]
    b_all = jnp.concatenate(b_parts, axis=-1)                       # [1, W]

    N = flat.shape[0]
    csum = sum(num_classes)
    return pl.pallas_call(
        functools.partial(_heads_kernel, num_classes=tuple(num_classes),
                          with_trans=bool(with_trans)),
        out_shape=jax.ShapeDtypeStruct((N, csum), jnp.float32),
        in_specs=[_VMEM] * 3,
        out_specs=_VMEM,
    )(flat, w_all, b_all)


def uni_trans_gru_forward(feature, params, *, epoch, start_epoch=-1):
    """Pallas implementation of UniTransGRUPrediction.forward.

    feature: [B, T, F] float32.  Returns dict {0: [B,T,C0], 1: [B,T,C1], ...}.
    """
    B, T, _ = feature.shape
    num_classes = [w.shape[-1] for (w, _) in params["fc"]]
    with_trans = epoch >= start_epoch                       # static Python branch

    temporal = gru_bidir(feature, params["gru"])            # [B, T, 2H]
    flat = temporal.reshape(B * T, temporal.shape[-1])      # free contiguous collapse

    packed = _fused_heads(flat, params, num_classes, with_trans).reshape(B, T, -1)

    results = {}
    off = 0
    for lvl, c in enumerate(num_classes):
        results[lvl] = packed[:, :, off:off + c]
        off += c
    return results


# --------------------------------------------------------------------------
# Pure-JAX reference (independent implementation, same bf16-MXU numerics)
# --------------------------------------------------------------------------
def _bf16(x):
    return x.astype(jnp.bfloat16)


def _gru_dir_ref(x_btf, wih, whh, bih, bhh, reverse):
    B = x_btf.shape[0]
    H = wih.shape[-1]

    def step(h, x_t):
        gx_r = jnp.dot(_bf16(x_t), _bf16(wih[0]), preferred_element_type=jnp.float32) + bih[0]
        gx_z = jnp.dot(_bf16(x_t), _bf16(wih[1]), preferred_element_type=jnp.float32) + bih[1]
        gx_n = jnp.dot(_bf16(x_t), _bf16(wih[2]), preferred_element_type=jnp.float32) + bih[2]
        gh_r = jnp.dot(_bf16(h), _bf16(whh[0]), preferred_element_type=jnp.float32) + bhh[0]
        gh_z = jnp.dot(_bf16(h), _bf16(whh[1]), preferred_element_type=jnp.float32) + bhh[1]
        gh_n = jnp.dot(_bf16(h), _bf16(whh[2]), preferred_element_type=jnp.float32) + bhh[2]
        r = jax.nn.sigmoid(gx_r + gh_r)
        z = jax.nn.sigmoid(gx_z + gh_z)
        n = jnp.tanh(gx_n + r * gh_n)
        h_new = (1.0 - z) * n + z * h
        return h_new, h_new

    xs = jnp.transpose(x_btf, (1, 0, 2))
    h0 = jnp.zeros((B, H), jnp.float32)
    _, hs = jax.lax.scan(step, h0, xs, reverse=reverse)
    return jnp.transpose(hs, (1, 0, 2))


def _forward_ref(feature, params, *, epoch, start_epoch=-1):
    g = params["gru"]
    hf = _gru_dir_ref(feature, g["wih_f"], g["whh_f"], g["bih_f"], g["bhh_f"], False)
    hb = _gru_dir_ref(feature, g["wih_b"], g["whh_b"], g["bih_b"], g["bhh_b"], True)
    temporal = jnp.concatenate([hf, hb], axis=-1)

    def lin(x, w, b):
        return jnp.dot(_bf16(x), _bf16(w), preferred_element_type=jnp.float32) + b

    logits = [lin(temporal, w, b) for (w, b) in params["fc"]]
    levels = len(params["fc"]) - 1
    results = {0: logits[0]}
    for i in range(levels):
        if epoch >= start_epoch:
            row = lin(temporal, *params["row"][i])
            col = lin(temporal, *params["col"][i])
            trans = row * jnp.sum(col * logits[i], axis=-1, keepdims=True)
        else:
            trans = jnp.zeros_like(logits[i + 1])
        results[i + 1] = logits[i + 1] + trans
    return results


# --------------------------------------------------------------------------
# Deterministic parameter init (shapes match the nn.Module __init__)
# --------------------------------------------------------------------------
def init_params(key, feat_dim, hidden_dim, num_classes):
    def uni(k, shape, scale):
        return jax.random.uniform(k, shape, jnp.float32, -scale, scale)

    keys = iter(jax.random.split(key, 64))
    s_gru = 1.0 / (hidden_dim ** 0.5)
    s_fc = 1.0 / ((2 * hidden_dim) ** 0.5)

    gru = {
        "wih_f": uni(next(keys), (3, feat_dim, hidden_dim), s_gru),
        "whh_f": uni(next(keys), (3, hidden_dim, hidden_dim), s_gru),
        "bih_f": uni(next(keys), (3, 1, hidden_dim), s_gru),
        "bhh_f": uni(next(keys), (3, 1, hidden_dim), s_gru),
        "wih_b": uni(next(keys), (3, feat_dim, hidden_dim), s_gru),
        "whh_b": uni(next(keys), (3, hidden_dim, hidden_dim), s_gru),
        "bih_b": uni(next(keys), (3, 1, hidden_dim), s_gru),
        "bhh_b": uni(next(keys), (3, 1, hidden_dim), s_gru),
    }
    fc = [(uni(next(keys), (2 * hidden_dim, nc), s_fc),
           uni(next(keys), (1, nc), s_fc)) for nc in num_classes]
    row = [(uni(next(keys), (2 * hidden_dim, r), s_fc),
            uni(next(keys), (1, r), s_fc)) for r in num_classes[1:]]
    col = [(uni(next(keys), (2 * hidden_dim, c), s_fc),
            uni(next(keys), (1, c), s_fc)) for c in num_classes[:-1]]
    return {"gru": gru, "fc": fc, "row": row, "col": col}


# --------------------------------------------------------------------------
if __name__ == "__main__":
    B, T, F, H = 2, 8, 16, 32
    num_classes = [4, 6, 8]
    start_epoch = -1
    epoch = 0

    key = jax.random.PRNGKey(0)
    k_param, k_feat = jax.random.split(key)
    params = init_params(k_param, F, H, num_classes)
    feature = jax.random.normal(k_feat, (B, T, F), jnp.float32)

    fwd = jax.jit(functools.partial(uni_trans_gru_forward,
                                    epoch=epoch, start_epoch=start_epoch))
    results = fwd(feature, params)
    jax.block_until_ready(results)

    ref = _forward_ref(feature, params, epoch=epoch, start_epoch=start_epoch)
    for lvl, nc in enumerate(num_classes):
        assert results[lvl].shape == (B, T, nc), results[lvl].shape
        # tolerance accounts for bf16-MXU rounding of the two independent
        # implementations (real structural bugs would be O(0.1) or larger)
        assert jnp.allclose(results[lvl], ref[lvl], atol=5e-3, rtol=5e-3), lvl

    print("KERNEL_OK")
</pallas_src>

<mosaic_0001>
module attributes {stable_mosaic.version = 11 : i64} {
  func.func @_heads_kernel(%arg0: memref<16x64xf32, #tpu.memory_space<vmem>>, %arg1: memref<64x42xbf16, #tpu.memory_space<vmem>>, %arg2: memref<1x42xf32, #tpu.memory_space<vmem>>, %arg3: memref<16x18xf32, #tpu.memory_space<vmem>>) attributes {dimension_semantics = [], scalar_prefetch = 0 : i64, scratch_operands = 0 : i64, tpu.core_type = #tpu.core_type<tc>} {
    %c0 = arith.constant 0 : index
    %c0_0 = arith.constant 0 : index
    %0 = vector.load %arg0[%c0, %c0_0] : memref<16x64xf32, #tpu.memory_space<vmem>>, vector<16x64xf32>
    %1 = arith.truncf %0 : vector<16x64xf32> to vector<16x64xbf16>
    %c0_1 = arith.constant 0 : index
    %c0_2 = arith.constant 0 : index
    %2 = vector.load %arg1[%c0_1, %c0_2] : memref<64x42xbf16, #tpu.memory_space<vmem>>, vector<64x42xbf16>
    %cst = arith.constant dense<0.000000e+00> : vector<16x42xf32>
    %3 = tpu.matmul %1, %2, %cst {dimension_numbers = #tpu.dot_dimension_numbers<[1], [0], [0], [1], [0, 0, 1, 1], [], []>} : vector<16x64xbf16>, vector<64x42xbf16>, vector<16x42xf32> -> vector<16x42xf32>
    %c0_3 = arith.constant 0 : index
    %c0_4 = arith.constant 0 : index
    %4 = vector.load %arg2[%c0_3, %c0_4] : memref<1x42xf32, #tpu.memory_space<vmem>>, vector<1x42xf32>
    %5 = vector.broadcast %4 : vector<1x42xf32> to vector<16x42xf32>
    %6 = arith.addf %3, %5 : vector<16x42xf32>
    %7 = vector.extract_strided_slice %6 {offsets = [0, 0], sizes = [16, 4], strides = [1, 1]} : vector<16x42xf32> to vector<16x4xf32>
    %8 = vector.extract_strided_slice %6 {offsets = [0, 4], sizes = [16, 6], strides = [1, 1]} : vector<16x42xf32> to vector<16x6xf32>
    %9 = vector.extract_strided_slice %6 {offsets = [0, 10], sizes = [16, 8], strides = [1, 1]} : vector<16x42xf32> to vector<16x8xf32>
    %10 = vector.extract_strided_slice %6 {offsets = [0, 18], sizes = [16, 6], strides = [1, 1]} : vector<16x42xf32> to vector<16x6xf32>
    %11 = vector.extract_strided_slice %6 {offsets = [0, 24], sizes = [16, 8], strides = [1, 1]} : vector<16x42xf32> to vector<16x8xf32>
    %12 = vector.extract_strided_slice %6 {offsets = [0, 32], sizes = [16, 4], strides = [1, 1]} : vector<16x42xf32> to vector<16x4xf32>
    %13 = vector.extract_strided_slice %6 {offsets = [0, 36], sizes = [16, 6], strides = [1, 1]} : vector<16x42xf32> to vector<16x6xf32>
    %14 = arith.mulf %12, %7 : vector<16x4xf32>
    %cst_5 = arith.constant dense<0.000000e+00> : vector<16xf32>
    %15 = vector.multi_reduction <add>, %14, %cst_5 [1] : vector<16x4xf32> to vector<16xf32>
    %16 = vector.shape_cast %15 : vector<16xf32> to vector<16x1xf32>
    %17 = vector.broadcast %16 : vector<16x1xf32> to vector<16x6xf32>
    %18 = arith.mulf %10, %17 : vector<16x6xf32>
    %19 = arith.addf %8, %18 : vector<16x6xf32>
    %20 = arith.mulf %13, %8 : vector<16x6xf32>
    %cst_6 = arith.constant dense<0.000000e+00> : vector<16xf32>
    %21 = vector.multi_reduction <add>, %20, %cst_6 [1] : vector<16x6xf32> to vector<16xf32>
    %22 = vector.shape_cast %21 : vector<16xf32> to vector<16x1xf32>
    %23 = vector.broadcast %22 : vector<16x1xf32> to vector<16x8xf32>
    %24 = arith.mulf %11, %23 : vector<16x8xf32>
    %25 = arith.addf %9, %24 : vector<16x8xf32>
    %c0_7 = arith.constant 0 : index
    %c0_8 = arith.constant 0 : index
    %26 = vector.load %arg3[%c0_7, %c0_8] : memref<16x18xf32, #tpu.memory_space<vmem>>, vector<16x4xf32>
    tpu.vector_store %arg3[%c0_7, %c0_8], %7 {strides = array<i32>} : memref<16x18xf32, #tpu.memory_space<vmem>>, vector<16x4xf32>,
    %c0_9 = arith.constant 0 : index
    %c4 = arith.constant 4 : index
    %27 = vector.load %arg3[%c0_9, %c4] : memref<16x18xf32, #tpu.memory_space<vmem>>, vector<16x6xf32>
    tpu.vector_store %arg3[%c0_9, %c4], %19 {strides = array<i32>} : memref<16x18xf32, #tpu.memory_space<vmem>>, vector<16x6xf32>,
    %c0_10 = arith.constant 0 : index
    %c10 = arith.constant 10 : index
    %28 = vector.load %arg3[%c0_10, %c10] : memref<16x18xf32, #tpu.memory_space<vmem>>, vector<16x8xf32>
    tpu.vector_store %arg3[%c0_10, %c10], %25 {strides = array<i32>} : memref<16x18xf32, #tpu.memory_space<vmem>>, vector<16x8xf32>,
    return
  }
}

module attributes {stable_mosaic.version = 11 : i64} {
  func.func @_bigru_kernel(%arg0: memref<2x8x96xf32, #tpu.memory_space<vmem>>, %arg1: memref<2x8x96xf32, #tpu.memory_space<vmem>>, %arg2: memref<32x96xbf16, #tpu.memory_space<vmem>>, %arg3: memref<32x96xbf16, #tpu.memory_space<vmem>>, %arg4: memref<1x96xf32, #tpu.memory_space<vmem>>, %arg5: memref<1x96xf32, #tpu.memory_space<vmem>>, %arg6: memref<2x8x64xf32, #tpu.memory_space<vmem>>) attributes {dimension_semantics = [], scalar_prefetch = 0 : i64, scratch_operands = 0 : i64, tpu.core_type = #tpu.core_type<tc>} {
    %c0 = arith.constant 0 : index
    %c0_0 = arith.constant 0 : index
    %c0_1 = arith.constant 0 : index
    %0 = vector.load %arg0[%c0, %c0_0, %c0_1] : memref<2x8x96xf32, #tpu.memory_space<vmem>>, vector<2x8x96xf32>
    %c0_2 = arith.constant 0 : index
    %c0_3 = arith.constant 0 : index
    %c0_4 = arith.constant 0 : index
    %1 = vector.load %arg1[%c0_2, %c0_3, %c0_4] : memref<2x8x96xf32, #tpu.memory_space<vmem>>, vector<2x8x96xf32>
    %c0_5 = arith.constant 0 : index
    %c0_6 = arith.constant 0 : index
    %2 = vector.load %arg2[%c0_5, %c0_6] : memref<32x96xbf16, #tpu.memory_space<vmem>>, vector<32x96xbf16>
    %c0_7 = arith.constant 0 : index
    %c0_8 = arith.constant 0 : index
    %3 = vector.load %arg3[%c0_7, %c0_8] : memref<32x96xbf16, #tpu.memory_space<vmem>>, vector<32x96xbf16>
    %c0_9 = arith.constant 0 : index
    %c0_10 = arith.constant 0 : index
    %4 = vector.load %arg4[%c0_9, %c0_10] : memref<1x96xf32, #tpu.memory_space<vmem>>, vector<1x96xf32>
    %c0_11 = arith.constant 0 : index
    %c0_12 = arith.constant 0 : index
    %5 = vector.load %arg5[%c0_11, %c0_12] : memref<1x96xf32, #tpu.memory_space<vmem>>, vector<1x96xf32>
    %cst = arith.constant 0.000000e+00 : f32
    %6 = vector.broadcast %cst : f32 to vector<2x32xf32>
    %cst_13 = arith.constant 0.000000e+00 : f32
    %7 = vector.broadcast %cst_13 : f32 to vector<2x32xf32>
    %8 = vector.extract_strided_slice %0 {offsets = [0, 0, 0], sizes = [2, 1, 96], strides = [1, 1, 1]} : vector<2x8x96xf32> to vector<2x1x96xf32>
    %9 = vector.shape_cast %8 : vector<2x1x96xf32> to vector<2x96xf32>
    %10 = arith.truncf %6 : vector<2x32xf32> to vector<2x32xbf16>
    %cst_14 = arith.constant dense<0.000000e+00> : vector<2x96xf32>
    %11 = tpu.matmul %10, %2, %cst_14 {dimension_numbers = #tpu.dot_dimension_numbers<[1], [0], [0], [1], [0, 0, 1, 1], [], []>} : vector<2x32xbf16>, vector<32x96xbf16>, vector<2x96xf32> -> vector<2x96xf32>
    %12 = vector.broadcast %4 : vector<1x96xf32> to vector<2x96xf32>
    %13 = arith.addf %11, %12 : vector<2x96xf32>
    %14 = vector.extract_strided_slice %9 {offsets = [0, 0], sizes = [2, 32], strides = [1, 1]} : vector<2x96xf32> to vector<2x32xf32>
    %15 = vector.extract_strided_slice %13 {offsets = [0, 0], sizes = [2, 32], strides = [1, 1]} : vector<2x96xf32> to vector<2x32xf32>
    %16 = arith.addf %14, %15 : vector<2x32xf32>
    %17 = arith.negf %16 : vector<2x32xf32>
    %18 = math.exp %17 : vector<2x32xf32>
    %cst_15 = arith.constant 1.000000e+00 : f32
    %19 = vector.broadcast %cst_15 : f32 to vector<2x32xf32>
    %20 = arith.addf %19, %18 : vector<2x32xf32>
    %21 = arith.divf %19, %20 : vector<2x32xf32>
    %22 = vector.extract_strided_slice %9 {offsets = [0, 32], sizes = [2, 32], strides = [1, 1]} : vector<2x96xf32> to vector<2x32xf32>
    %23 = vector.extract_strided_slice %13 {offsets = [0, 32], sizes = [2, 32], strides = [1, 1]} : vector<2x96xf32> to vector<2x32xf32>
    %24 = arith.addf %22, %23 : vector<2x32xf32>
    %25 = arith.negf %24 : vector<2x32xf32>
    %26 = math.exp %25 : vector<2x32xf32>
    %cst_16 = arith.constant 1.000000e+00 : f32
    %27 = vector.broadcast %cst_16 : f32 to vector<2x32xf32>
    %28 = arith.addf %27, %26 : vector<2x32xf32>
    %29 = arith.divf %27, %28 : vector<2x32xf32>
    %30 = vector.extract_strided_slice %9 {offsets = [0, 64], sizes = [2, 32], strides = [1, 1]} : vector<2x96xf32> to vector<2x32xf32>
    %31 = vector.extract_strided_slice %13 {offsets = [0, 64], sizes = [2, 32], strides = [1, 1]} : vector<2x96xf32> to vector<2x32xf32>
    %32 = arith.mulf %21, %31 : vector<2x32xf32>
    %33 = arith.addf %30, %32 : vector<2x32xf32>
    %34 = math.tanh %33 : vector<2x32xf32>
    %cst_17 = arith.constant 1.000000e+00 : f32
    %35 = vector.broadcast %cst_17 : f32 to vector<2x32xf32>
    %36 = arith.subf %35, %29 : vector<2x32xf32>
    %37 = arith.mulf %36, %34 : vector<2x32xf32>
    %38 = arith.mulf %29, %6 : vector<2x32xf32>
    %39 = arith.addf %37, %38 : vector<2x32xf32>
    %40 = vector.extract_strided_slice %1 {offsets = [0, 7, 0], sizes = [2, 1, 96], strides = [1, 1, 1]} : vector<2x8x96xf32> to vector<2x1x96xf32>
    %41 = vector.shape_cast %40 : vector<2x1x96xf32> to vector<2x96xf32>
    %42 = arith.truncf %7 : vector<2x32xf32> to vector<2x32xbf16>
    %cst_18 = arith.constant dense<0.000000e+00> : vector<2x96xf32>
    %43 = tpu.matmul %42, %3, %cst_18 {dimension_numbers = #tpu.dot_dimension_numbers<[1], [0], [0], [1], [0, 0, 1, 1], [], []>} : vector<2x32xbf16>, vector<32x96xbf16>, vector<2x96xf32> -> vector<2x96xf32>
    %44 = vector.broadcast %5 : vector<1x96xf32> to vector<2x96xf32>
    %45 = arith.addf %43, %44 : vector<2x96xf32>
    %46 = vector.extract_strided_slice %41 {offsets = [0, 0], sizes = [2, 32], strides = [1, 1]} : vector<2x96xf32> to vector<2x32xf32>
    %47 = vector.extract_strided_slice %45 {offsets = [0, 0], sizes = [2, 32], strides = [1, 1]} : vector<2x96xf32> to vector<2x32xf32>
    %48 = arith.addf %46, %47 : vector<2x32xf32>
    %49 = arith.negf %48 : vector<2x32xf32>
    %50 = math.exp %49 : vector<2x32xf32>
    %cst_19 = arith.constant 1.000000e+00 : f32
    %51 = vector.broadcast %cst_19 : f32 to vector<2x32xf32>
    %52 = arith.addf %51, %50 : vector<2x32xf32>
    %53 = arith.divf %51, %52 : vector<2x32xf32>
    %54 = vector.extract_strided_slice %41 {offsets = [0, 32], sizes = [2, 32], strides = [1, 1]} : vector<2x96xf32> to vector<2x32xf32>
    %55 = vector.extract_strided_slice %45 {offsets = [0, 32], sizes = [2, 32], strides = [1, 1]} : vector<2x96xf32> to vector<2x32xf32>
    %56 = arith.addf %54, %55 : vector<2x32xf32>
    %57 = arith.negf %56 : vector<2x32xf32>
    %58 = math.exp %57 : vector<2x32xf32>
    %cst_20 = arith.constant 1.000000e+00 : f32
    %59 = vector.broadcast %cst_20 : f32 to vector<2x32xf32>
    %60 = arith.addf %59, %58 : vector<2x32xf32>
    %61 = arith.divf %59, %60 : vector<2x32xf32>
    %62 = vector.extract_strided_slice %41 {offsets = [0, 64], sizes = [2, 32], strides = [1, 1]} : vector<2x96xf32> to vector<2x32xf32>
    %63 = vector.extract_strided_slice %45 {offsets = [0, 64], sizes = [2, 32], strides = [1, 1]} : vector<2x96xf32> to vector<2x32xf32>
    %64 = arith.mulf %53, %63 : vector<2x32xf32>
    %65 = arith.addf %62, %64 : vector<2x32xf32>
    %66 = math.tanh %65 : vector<2x32xf32>
    %cst_21 = arith.constant 1.000000e+00 : f32
    %67 = vector.broadcast %cst_21 : f32 to vector<2x32xf32>
    %68 = arith.subf %67, %61 : vector<2x32xf32>
    %69 = arith.mulf %68, %66 : vector<2x32xf32>
    %70 = arith.mulf %61, %7 : vector<2x32xf32>
    %71 = arith.addf %69, %70 : vector<2x32xf32>
    %c0_22 = arith.constant 0 : index
    %c0_23 = arith.constant 0 : index
    %c0_24 = arith.constant 0 : index
    %72 = vector.load %arg6[%c0_22, %c0_23, %c0_24] : memref<2x8x64xf32, #tpu.memory_space<vmem>>, vector<2x1x32xf32>
    %73 = vector.shape_cast %72 : vector<2x1x32xf32> to vector<2x32xf32>
    %74 = vector.shape_cast %39 : vector<2x32xf32> to vector<2x1x32xf32>
    tpu.vector_store %arg6[%c0_22, %c0_23, %c0_24], %74 {strides = array<i32>} : memref<2x8x64xf32, #tpu.memory_space<vmem>>, vector<2x1x32xf32>,
    %c0_25 = arith.constant 0 : index
    %c7 = arith.constant 7 : index
    %c32 = arith.constant 32 : index
    %75 = vector.load %arg6[%c0_25, %c7, %c32] : memref<2x8x64xf32, #tpu.memory_space<vmem>>, vector<2x1x32xf32>
    %76 = vector.shape_cast %75 : vector<2x1x32xf32> to vector<2x32xf32>
    %77 = vector.shape_cast %71 : vector<2x32xf32> to vector<2x1x32xf32>
    tpu.vector_store %arg6[%c0_25, %c7, %c32], %77 {strides = array<i32>} : memref<2x8x64xf32, #tpu.memory_space<vmem>>, vector<2x1x32xf32>,
    %78 = vector.extract_strided_slice %0 {offsets = [0, 1, 0], sizes = [2, 1, 96], strides = [1, 1, 1]} : vector<2x8x96xf32> to vector<2x1x96xf32>
    %79 = vector.shape_cast %78 : vector<2x1x96xf32> to vector<2x96xf32>
    %80 = arith.truncf %39 : vector<2x32xf32> to vector<2x32xbf16>
    %cst_26 = arith.constant dense<0.000000e+00> : vector<2x96xf32>
    %81 = tpu.matmul %80, %2, %cst_26 {dimension_numbers = #tpu.dot_dimension_numbers<[1], [0], [0], [1], [0, 0, 1, 1], [], []>} : vector<2x32xbf16>, vector<32x96xbf16>, vector<2x96xf32> -> vector<2x96xf32>
    %82 = vector.broadcast %4 : vector<1x96xf32> to vector<2x96xf32>
    %83 = arith.addf %81, %82 : vector<2x96xf32>
    %84 = vector.extract_strided_slice %79 {offsets = [0, 0], sizes = [2, 32], strides = [1, 1]} : vector<2x96xf32> to vector<2x32xf32>
    %85 = vector.extract_strided_slice %83 {offsets = [0, 0], sizes = [2, 32], strides = [1, 1]} : vector<2x96xf32> to vector<2x32xf32>
    %86 = arith.addf %84, %85 : vector<2x32xf32>
    %87 = arith.negf %86 : vector<2x32xf32>
    %88 = math.exp %87 : vector<2x32xf32>
    %cst_27 = arith.constant 1.000000e+00 : f32
    %89 = vector.broadcast %cst_27 : f32 to vector<2x32xf32>
    %90 = arith.addf %89, %88 : vector<2x32xf32>
    %91 = arith.divf %89, %90 : vector<2x32xf32>
    %92 = vector.extract_strided_slice %79 {offsets = [0, 32], sizes = [2, 32], strides = [1, 1]} : vector<2x96xf32> to vector<2x32xf32>
    %93 = vector.extract_strided_slice %83 {offsets = [0, 32], sizes = [2, 32], strides = [1, 1]} : vector<2x96xf32> to vector<2x32xf32>
    %94 = arith.addf %92, %93 : vector<2x32xf32>
    %95 = arith.negf %94 : vector<2x32xf32>
    %96 = math.exp %95 : vector<2x32xf32>
    %cst_28 = arith.constant 1.000000e+00 : f32
    %97 = vector.broadcast %cst_28 : f32 to vector<2x32xf32>
    %98 = arith.addf %97, %96 : vector<2x32xf32>
    %99 = arith.divf %97, %98 : vector<2x32xf32>
    %100 = vector.extract_strided_slice %79 {offsets = [0, 64], sizes = [2, 32], strides = [1, 1]} : vector<2x96xf32> to vector<2x32xf32>
    %101 = vector.extract_strided_slice %83 {offsets = [0, 64], sizes = [2, 32], strides = [1, 1]} : vector<2x96xf32> to vector<2x32xf32>
    %102 = arith.mulf %91, %101 : vector<2x32xf32>
    %103 = arith.addf %100, %102 : vector<2x32xf32>
    %104 = math.tanh %103 : vector<2x32xf32>
    %cst_29 = arith.constant 1.000000e+00 : f32
    %105 = vector.broadcast %cst_29 : f32 to vector<2x32xf32>
    %106 = arith.subf %105, %99 : vector<2x32xf32>
    %107 = arith.mulf %106, %104 : vector<2x32xf32>
    %108 = arith.mulf %99, %39 : vector<2x32xf32>
    %109 = arith.addf %107, %108 : vector<2x32xf32>
    %110 = vector.extract_strided_slice %1 {offsets = [0, 6, 0], sizes = [2, 1, 96], strides = [1, 1, 1]} : vector<2x8x96xf32> to vector<2x1x96xf32>
    %111 = vector.shape_cast %110 : vector<2x1x96xf32> to vector<2x96xf32>
    %112 = arith.truncf %71 : vector<2x32xf32> to vector<2x32xbf16>
    %cst_30 = arith.constant dense<0.000000e+00> : vector<2x96xf32>
    %113 = tpu.matmul %112, %3, %cst_30 {dimension_numbers = #tpu.dot_dimension_numbers<[1], [0], [0], [1], [0, 0, 1, 1], [], []>} : vector<2x32xbf16>, vector<32x96xbf16>, vector<2x96xf32> -> vector<2x96xf32>
    %114 = vector.broadcast %5 : vector<1x96xf32> to vector<2x96xf32>
    %115 = arith.addf %113, %114 : vector<2x96xf32>
    %116 = vector.extract_strided_slice %111 {offsets = [0, 0], sizes = [2, 32], strides = [1, 1]} : vector<2x96xf32> to vector<2x32xf32>
    %117 = vector.extract_strided_slice %115 {offsets = [0, 0], sizes = [2, 32], strides = [1, 1]} : vector<2x96xf32> to vector<2x32xf32>
    %118 = arith.addf %116, %117 : vector<2x32xf32>
    %119 = arith.negf %118 : vector<2x32xf32>
    %120 = math.exp %119 : vector<2x32xf32>
    %cst_31 = arith.constant 1.000000e+00 : f32
    %121 = vector.broadcast %cst_31 : f32 to vector<2x32xf32>
    %122 = arith.addf %121, %120 : vector<2x32xf32>
    %123 = arith.divf %121, %122 : vector<2x32xf32>
    %124 = vector.extract_strided_slice %111 {offsets = [0, 32], sizes = [2, 32], strides = [1, 1]} : vector<2x96xf32> to vector<2x32xf32>
    %125 = vector.extract_strided_slice %115 {offsets = [0, 32], sizes = [2, 32], strides = [1, 1]} : vector<2x96xf32> to vector<2x32xf32>
    %126 = arith.addf %124, %125 : vector<2x32xf32>
    %127 = arith.negf %126 : vector<2x32xf32>
    %128 = math.exp %127 : vector<2x32xf32>
    %cst_32 = arith.constant 1.000000e+00 : f32
    %129 = vector.broadcast %cst_32 : f32 to vector<2x32xf32>
    %130 = arith.addf %129, %128 : vector<2x32xf32>
    %131 = arith.divf %129, %130 : vector<2x32xf32>
    %132 = vector.extract_strided_slice %111 {offsets = [0, 64], sizes = [2, 32], strides = [1, 1]} : vector<2x96xf32> to vector<2x32xf32>
    %133 = vector.extract_strided_slice %115 {offsets = [0, 64], sizes = [2, 32], strides = [1, 1]} : vector<2x96xf32> to vector<2x32xf32>
    %134 = arith.mulf %123, %133 : vector<2x32xf32>
    %135 = arith.addf %132, %134 : vector<2x32xf32>
    %136 = math.tanh %135 : vector<2x32xf32>
    %cst_33 = arith.constant 1.000000e+00 : f32
    %137 = vector.broadcast %cst_33 : f32 to vector<2x32xf32>
    %138 = arith.subf %137, %131 : vector<2x32xf32>
    %139 = arith.mulf %138, %136 : vector<2x32xf32>
    %140 = arith.mulf %131, %71 : vector<2x32xf32>
    %141 = arith.addf %139, %140 : vector<2x32xf32>
    %c0_34 = arith.constant 0 : index
    %c1 = arith.constant 1 : index
    %c0_35 = arith.constant 0 : index
    %142 = vector.load %arg6[%c0_34, %c1, %c0_35] : memref<2x8x64xf32, #tpu.memory_space<vmem>>, vector<2x1x32xf32>
    %143 = vector.shape_cast %142 : vector<2x1x32xf32> to vector<2x32xf32>
    %144 = vector.shape_cast %109 : vector<2x32xf32> to vector<2x1x32xf32>
    tpu.vector_store %arg6[%c0_34, %c1, %c0_35], %144 {strides = array<i32>} : memref<2x8x64xf32, #tpu.memory_space<vmem>>, vector<2x1x32xf32>,
    %c0_36 = arith.constant 0 : index
    %c6 = arith.constant 6 : index
    %c32_37 = arith.constant 32 : index
    %145 = vector.load %arg6[%c0_36, %c6, %c32_37] : memref<2x8x64xf32, #tpu.memory_space<vmem>>, vector<2x1x32xf32>
    %146 = vector.shape_cast %145 : vector<2x1x32xf32> to vector<2x32xf32>
    %147 = vector.shape_cast %141 : vector<2x32xf32> to vector<2x1x32xf32>
    tpu.vector_store %arg6[%c0_36, %c6, %c32_37], %147 {strides = array<i32>} : memref<2x8x64xf32, #tpu.memory_space<vmem>>, vector<2x1x32xf32>,
    %148 = vector.extract_strided_slice %0 {offsets = [0, 2, 0], sizes = [2, 1, 96], strides = [1, 1, 1]} : vector<2x8x96xf32> to vector<2x1x96xf32>
    %149 = vector.shape_cast %148 : vector<2x1x96xf32> to vector<2x96xf32>
    %150 = arith.truncf %109 : vector<2x32xf32> to vector<2x32xbf16>
    %cst_38 = arith.constant dense<0.000000e+00> : vector<2x96xf32>
    %151 = tpu.matmul %150, %2, %cst_38 {dimension_numbers = #tpu.dot_dimension_numbers<[1], [0], [0], [1], [0, 0, 1, 1], [], []>} : vector<2x32xbf16>, vector<32x96xbf16>, vector<2x96xf32> -> vector<2x96xf32>
    %152 = vector.broadcast %4 : vector<1x96xf32> to vector<2x96xf32>
    %153 = arith.addf %151, %152 : vector<2x96xf32>
    %154 = vector.extract_strided_slice %149 {offsets = [0, 0], sizes = [2, 32], strides = [1, 1]} : vector<2x96xf32> to vector<2x32xf32>
    %155 = vector.extract_strided_slice %153 {offsets = [0, 0], sizes = [2, 32], strides = [1, 1]} : vector<2x96xf32> to vector<2x32xf32>
    %156 = arith.addf %154, %155 : vector<2x32xf32>
    %157 = arith.negf %156 : vector<2x32xf32>
    %158 = math.exp %157 : vector<2x32xf32>
    %cst_39 = arith.constant 1.000000e+00 : f32
    %159 = vector.broadcast %cst_39 : f32 to vector<2x32xf32>
    %160 = arith.addf %159, %158 : vector<2x32xf32>
    %161 = arith.divf %159, %160 : vector<2x32xf32>
    %162 = vector.extract_strided_slice %149 {offsets = [0, 32], sizes = [2, 32], strides = [1, 1]} : vector<2x96xf32> to vector<2x32xf32>
    %163 = vector.extract_strided_slice %153 {offsets = [0, 32], sizes = [2, 32], strides = [1, 1]} : vector<2x96xf32> to vector<2x32xf32>
    %164 = arith.addf %162, %163 : vector<2x32xf32>
    %165 = arith.negf %164 : vector<2x32xf32>
    %166 = math.exp %165 : vector<2x32xf32>
    %cst_40 = arith.constant 1.000000e+00 : f32
    %167 = vector.broadcast %cst_40 : f32 to vector<2x32xf32>
    %168 = arith.addf %167, %166 : vector<2x32xf32>
    %169 = arith.divf %167, %168 : vector<2x32xf32>
    %170 = vector.extract_strided_slice %149 {offsets = [0, 64], sizes = [2, 32], strides = [1, 1]} : vector<2x96xf32> to vector<2x32xf32>
    %171 = vector.extract_strided_slice %153 {offsets = [0, 64], sizes = [2, 32], strides = [1, 1]} : vector<2x96xf32> to vector<2x32xf32>
    %172 = arith.mulf %161, %171 : vector<2x32xf32>
    %173 = arith.addf %170, %172 : vector<2x32xf32>
    %174 = math.tanh %173 : vector<2x32xf32>
    %cst_41 = arith.constant 1.000000e+00 : f32
    %175 = vector.broadcast %cst_41 : f32 to vector<2x32xf32>
    %176 = arith.subf %175, %169 : vector<2x32xf32>
    %177 = arith.mulf %176, %174 : vector<2x32xf32>
    %178 = arith.mulf %169, %109 : vector<2x32xf32>
    %179 = arith.addf %177, %178 : vector<2x32xf32>
    %180 = vector.extract_strided_slice %1 {offsets = [0, 5, 0], sizes = [2, 1, 96], strides = [1, 1, 1]} : vector<2x8x96xf32> to vector<2x1x96xf32>
    %181 = vector.shape_cast %180 : vector<2x1x96xf32> to vector<2x96xf32>
    %182 = arith.truncf %141 : vector<2x32xf32> to vector<2x32xbf16>
    %cst_42 = arith.constant dense<0.000000e+00> : vector<2x96xf32>
    %183 = tpu.matmul %182, %3, %cst_42 {dimension_numbers = #tpu.dot_dimension_numbers<[1], [0], [0], [1], [0, 0, 1, 1], [], []>} : vector<2x32xbf16>, vector<32x96xbf16>, vector<2x96xf32> -> vector<2x96xf32>
    %184 = vector.broadcast %5 : vector<1x96xf32> to vector<2x96xf32>
    %185 = arith.addf %183, %184 : vector<2x96xf32>
    %186 = vector.extract_strided_slice %181 {offsets = [0, 0], sizes = [2, 32], strides = [1, 1]} : vector<2x96xf32> to vector<2x32xf32>
    %187 = vector.extract_strided_slice %185 {offsets = [0, 0], sizes = [2, 32], strides = [1, 1]} : vector<2x96xf32> to vector<2x32xf32>
    %188 = arith.addf %186, %187 : vector<2x32xf32>
    %189 = arith.negf %188 : vector<2x32xf32>
    %190 = math.exp %189 : vector<2x32xf32>
    %cst_43 = arith.constant 1.000000e+00 : f32
    %191 = vector.broadcast %cst_43 : f32 to vector<2x32xf32>
    %192 = arith.addf %191, %190 : vector<2x32xf32>
    %193 = arith.divf %191, %192 : vector<2x32xf32>
    %194 = vector.extract_strided_slice %181 {offsets = [0, 32], sizes = [2, 32], strides = [1, 1]} : vector<2x96xf32> to vector<2x32xf32>
    %195 = vector.extract_strided_slice %185 {offsets = [0, 32], sizes = [2, 32], strides = [1, 1]} : vector<2x96xf32> to vector<2x32xf32>
    %196 = arith.addf %194, %195 : vector<2x32xf32>
    %197 = arith.negf %196 : vector<2x32xf32>
    %198 = math.exp %197 : vector<2x32xf32>
    %cst_44 = arith.constant 1.000000e+00 : f32
    %199 = vector.broadcast %cst_44 : f32 to vector<2x32xf32>
    %200 = arith.addf %199, %198 : vector<2x32xf32>
    %201 = arith.divf %199, %200 : vector<2x32xf32>
    %202 = vector.extract_strided_slice %181 {offsets = [0, 64], sizes = [2, 32], strides = [1, 1]} : vector<2x96xf32> to vector<2x32xf32>
    %203 = vector.extract_strided_slice %185 {offsets = [0, 64], sizes = [2, 32], strides = [1, 1]} : vector<2x96xf32> to vector<2x32xf32>
    %204 = arith.mulf %193, %203 : vector<2x32xf32>
    %205 = arith.addf %202, %204 : vector<2x32xf32>
    %206 = math.tanh %205 : vector<2x32xf32>
    %cst_45 = arith.constant 1.000000e+00 : f32
    %207 = vector.broadcast %cst_45 : f32 to vector<2x32xf32>
    %208 = arith.subf %207, %201 : vector<2x32xf32>
    %209 = arith.mulf %208, %206 : vector<2x32xf32>
    %210 = arith.mulf %201, %141 : vector<2x32xf32>
    %211 = arith.addf %209, %210 : vector<2x32xf32>
    %c0_46 = arith.constant 0 : index
    %c2 = arith.constant 2 : index
    %c0_47 = arith.constant 0 : index
    %212 = vector.load %arg6[%c0_46, %c2, %c0_47] : memref<2x8x64xf32, #tpu.memory_space<vmem>>, vector<2x1x32xf32>
    %213 = vector.shape_cast %212 : vector<2x1x32xf32> to vector<2x32xf32>
    %214 = vector.shape_cast %179 : vector<2x32xf32> to vector<2x1x32xf32>
    tpu.vector_store %arg6[%c0_46, %c2, %c0_47], %214 {strides = array<i32>} : memref<2x8x64xf32, #tpu.memory_space<vmem>>, vector<2x1x32xf32>,
    %c0_48 = arith.constant 0 : index
    %c5 = arith.constant 5 : index
    %c32_49 = arith.constant 32 : index
    %215 = vector.load %arg6[%c0_48, %c5, %c32_49] : memref<2x8x64xf32, #tpu.memory_space<vmem>>, vector<2x1x32xf32>
    %216 = vector.shape_cast %215 : vector<2x1x32xf32> to vector<2x32xf32>
    %217 = vector.shape_cast %211 : vector<2x32xf32> to vector<2x1x32xf32>
    tpu.vector_store %arg6[%c0_48, %c5, %c32_49], %217 {strides = array<i32>} : memref<2x8x64xf32, #tpu.memory_space<vmem>>, vector<2x1x32xf32>,
    %218 = vector.extract_strided_slice %0 {offsets = [0, 3, 0], sizes = [2, 1, 96], strides = [1, 1, 1]} : vector<2x8x96xf32> to vector<2x1x96xf32>
    %219 = vector.shape_cast %218 : vector<2x1x96xf32> to vector<2x96xf32>
    %220 = arith.truncf %179 : vector<2x32xf32> to vector<2x32xbf16>
    %cst_50 = arith.constant dense<0.000000e+00> : vector<2x96xf32>
    %221 = tpu.matmul %220, %2, %cst_50 {dimension_numbers = #tpu.dot_dimension_numbers<[1], [0], [0], [1], [0, 0, 1, 1], [], []>} : vector<2x32xbf16>, vector<32x96xbf16>, vector<2x96xf32> -> vector<2x96xf32>
    %222 = vector.broadcast %4 : vector<1x96xf32> to vector<2x96xf32>
    %223 = arith.addf %221, %222 : vector<2x96xf32>
    %224 = vector.extract_strided_slice %219 {offsets = [0, 0], sizes = [2, 32], strides = [1, 1]} : vector<2x96xf32> to vector<2x32xf32>
    %225 = vector.extract_strided_slice %223 {offsets = [0, 0], sizes = [2, 32], strides = [1, 1]} : vector<2x96xf32> to vector<2x32xf32>
    %226 = arith.addf %224, %225 : vector<2x32xf32>
    %227 = arith.negf %226 : vector<2x32xf32>
    %228 = math.exp %227 : vector<2x32xf32>
    %cst_51 = arith.constant 1.000000e+00 : f32
    %229 = vector.broadcast %cst_51 : f32 to vector<2x32xf32>
    %230 = arith.addf %229, %228 : vector<2x32xf32>
    %231 = arith.divf %229, %230 : vector<2x32xf32>
    %232 = vector.extract_strided_slice %219 {offsets = [0, 32], sizes = [2, 32], strides = [1, 1]} : vector<2x96xf32> to vector<2x32xf32>
    %233 = vector.extract_strided_slice %223 {offsets = [0, 32], sizes = [2, 32], strides = [1, 1]} : vector<2x96xf32> to vector<2x32xf32>
    %234 = arith.addf %232, %233 : vector<2x32xf32>
    %235 = arith.negf %234 : vector<2x32xf32>
    %236 = math.exp %235 : vector<2x32xf32>
    %cst_52 = arith.constant 1.000000e+00 : f32
    %237 = vector.broadcast %cst_52 : f32 to vector<2x32xf32>
    %238 = arith.addf %237, %236 : vector<2x32xf32>
    %239 = arith.divf %237, %238 : vector<2x32xf32>
    %240 = vector.extract_strided_slice %219 {offsets = [0, 64], sizes = [2, 32], strides = [1, 1]} : vector<2x96xf32> to vector<2x32xf32>
    %241 = vector.extract_strided_slice %223 {offsets = [0, 64], sizes = [2, 32], strides = [1, 1]} : vector<2x96xf32> to vector<2x32xf32>
    %242 = arith.mulf %231, %241 : vector<2x32xf32>
    %243 = arith.addf %240, %242 : vector<2x32xf32>
    %244 = math.tanh %243 : vector<2x32xf32>
    %cst_53 = arith.constant 1.000000e+00 : f32
    %245 = vector.broadcast %cst_53 : f32 to vector<2x32xf32>
    %246 = arith.subf %245, %239 : vector<2x32xf32>
    %247 = arith.mulf %246, %244 : vector<2x32xf32>
    %248 = arith.mulf %239, %179 : vector<2x32xf32>
    %249 = arith.addf %247, %248 : vector<2x32xf32>
    %250 = vector.extract_strided_slice %1 {offsets = [0, 4, 0], sizes = [2, 1, 96], strides = [1, 1, 1]} : vector<2x8x96xf32> to vector<2x1x96xf32>
    %251 = vector.shape_cast %250 : vector<2x1x96xf32> to vector<2x96xf32>
    %252 = arith.truncf %211 : vector<2x32xf32> to vector<2x32xbf16>
    %cst_54 = arith.constant dense<0.000000e+00> : vector<2x96xf32>
    %253 = tpu.matmul %252, %3, %cst_54 {dimension_numbers = #tpu.dot_dimension_numbers<[1], [0], [0], [1], [0, 0, 1, 1], [], []>} : vector<2x32xbf16>, vector<32x96xbf16>, vector<2x96xf32> -> vector<2x96xf32>
    %254 = vector.broadcast %5 : vector<1x96xf32> to vector<2x96xf32>
    %255 = arith.addf %253, %254 : vector<2x96xf32>
    %256 = vector.extract_strided_slice %251 {offsets = [0, 0], sizes = [2, 32], strides = [1, 1]} : vector<2x96xf32> to vector<2x32xf32>
    %257 = vector.extract_strided_slice %255 {offsets = [0, 0], sizes = [2, 32], strides = [1, 1]} : vector<2x96xf32> to vector<2x32xf32>
    %258 = arith.addf %256, %257 : vector<2x32xf32>
    %259 = arith.negf %258 : vector<2x32xf32>
    %260 = math.exp %259 : vector<2x32xf32>
    %cst_55 = arith.constant 1.000000e+00 : f32
    %261 = vector.broadcast %cst_55 : f32 to vector<2x32xf32>
    %262 = arith.addf %261, %260 : vector<2x32xf32>
    %263 = arith.divf %261, %262 : vector<2x32xf32>
    %264 = vector.extract_strided_slice %251 {offsets = [0, 32], sizes = [2, 32], strides = [1, 1]} : vector<2x96xf32> to vector<2x32xf32>
    %265 = vector.extract_strided_slice %255 {offsets = [0, 32], sizes = [2, 32], strides = [1, 1]} : vector<2x96xf32> to vector<2x32xf32>
    %266 = arith.addf %264, %265 : vector<2x32xf32>
    %267 = arith.negf %266 : vector<2x32xf32>
    %268 = math.exp %267 : vector<2x32xf32>
    %cst_56 = arith.constant 1.000000e+00 : f32
    %269 = vector.broadcast %cst_56 : f32 to vector<2x32xf32>
    %270 = arith.addf %269, %268 : vector<2x32xf32>
    %271 = arith.divf %269, %270 : vector<2x32xf32>
    %272 = vector.extract_strided_slice %251 {offsets = [0, 64], sizes = [2, 32], strides = [1, 1]} : vector<2x96xf32> to vector<2x32xf32>
    %273 = vector.extract_strided_slice %255 {offsets = [0, 64], sizes = [2, 32], strides = [1, 1]} : vector<2x96xf32> to vector<2x32xf32>
    %274 = arith.mulf %263, %273 : vector<2x32xf32>
    %275 = arith.addf %272, %274 : vector<2x32xf32>
    %276 = math.tanh %275 : vector<2x32xf32>
    %cst_57 = arith.constant 1.000000e+00 : f32
    %277 = vector.broadcast %cst_57 : f32 to vector<2x32xf32>
    %278 = arith.subf %277, %271 : vector<2x32xf32>
    %279 = arith.mulf %278, %276 : vector<2x32xf32>
    %280 = arith.mulf %271, %211 : vector<2x32xf32>
    %281 = arith.addf %279, %280 : vector<2x32xf32>
    %c0_58 = arith.constant 0 : index
    %c3 = arith.constant 3 : index
    %c0_59 = arith.constant 0 : index
    %282 = vector.load %arg6[%c0_58, %c3, %c0_59] : memref<2x8x64xf32, #tpu.memory_space<vmem>>, vector<2x1x32xf32>
    %283 = vector.shape_cast %282 : vector<2x1x32xf32> to vector<2x32xf32>
    %284 = vector.shape_cast %249 : vector<2x32xf32> to vector<2x1x32xf32>
    tpu.vector_store %arg6[%c0_58, %c3, %c0_59], %284 {strides = array<i32>} : memref<2x8x64xf32, #tpu.memory_space<vmem>>, vector<2x1x32xf32>,
    %c0_60 = arith.constant 0 : index
    %c4 = arith.constant 4 : index
    %c32_61 = arith.constant 32 : index
    %285 = vector.load %arg6[%c0_60, %c4, %c32_61] : memref<2x8x64xf32, #tpu.memory_space<vmem>>, vector<2x1x32xf32>
    %286 = vector.shape_cast %285 : vector<2x1x32xf32> to vector<2x32xf32>
    %287 = vector.shape_cast %281 : vector<2x32xf32> to vector<2x1x32xf32>
    tpu.vector_store %arg6[%c0_60, %c4, %c32_61], %287 {strides = array<i32>} : memref<2x8x64xf32, #tpu.memory_space<vmem>>, vector<2x1x32xf32>,
    %288 = vector.extract_strided_slice %0 {offsets = [0, 4, 0], sizes = [2, 1, 96], strides = [1, 1, 1]} : vector<2x8x96xf32> to vector<2x1x96xf32>
    %289 = vector.shape_cast %288 : vector<2x1x96xf32> to vector<2x96xf32>
    %290 = arith.truncf %249 : vector<2x32xf32> to vector<2x32xbf16>
    %cst_62 = arith.constant dense<0.000000e+00> : vector<2x96xf32>
    %291 = tpu.matmul %290, %2, %cst_62 {dimension_numbers = #tpu.dot_dimension_numbers<[1], [0], [0], [1], [0, 0, 1, 1], [], []>} : vector<2x32xbf16>, vector<32x96xbf16>, vector<2x96xf32> -> vector<2x96xf32>
    %292 = vector.broadcast %4 : vector<1x96xf32> to vector<2x96xf32>
    %293 = arith.addf %291, %292 : vector<2x96xf32>
    %294 = vector.extract_strided_slice %289 {offsets = [0, 0], sizes = [2, 32], strides = [1, 1]} : vector<2x96xf32> to vector<2x32xf32>
    %295 = vector.extract_strided_slice %293 {offsets = [0, 0], sizes = [2, 32], strides = [1, 1]} : vector<2x96xf32> to vector<2x32xf32>
    %296 = arith.addf %294, %295 : vector<2x32xf32>
    %297 = arith.negf %296 : vector<2x32xf32>
    %298 = math.exp %297 : vector<2x32xf32>
    %cst_63 = arith.constant 1.000000e+00 : f32
    %299 = vector.broadcast %cst_63 : f32 to vector<2x32xf32>
    %300 = arith.addf %299, %298 : vector<2x32xf32>
    %301 = arith.divf %299, %300 : vector<2x32xf32>
    %302 = vector.extract_strided_slice %289 {offsets = [0, 32], sizes = [2, 32], strides = [1, 1]} : vector<2x96xf32> to vector<2x32xf32>
    %303 = vector.extract_strided_slice %293 {offsets = [0, 32], sizes = [2, 32], strides = [1, 1]} : vector<2x96xf32> to vector<2x32xf32>
    %304 = arith.addf %302, %303 : vector<2x32xf32>
    %305 = arith.negf %304 : vector<2x32xf32>
    %306 = math.exp %305 : vector<2x32xf32>
    %cst_64 = arith.constant 1.000000e+00 : f32
    %307 = vector.broadcast %cst_64 : f32 to vector<2x32xf32>
    %308 = arith.addf %307, %306 : vector<2x32xf32>
    %309 = arith.divf %307, %308 : vector<2x32xf32>
    %310 = vector.extract_strided_slice %289 {offsets = [0, 64], sizes = [2, 32], strides = [1, 1]} : vector<2x96xf32> to vector<2x32xf32>
    %311 = vector.extract_strided_slice %293 {offsets = [0, 64], sizes = [2, 32], strides = [1, 1]} : vector<2x96xf32> to vector<2x32xf32>
    %312 = arith.mulf %301, %311 : vector<2x32xf32>
    %313 = arith.addf %310, %312 : vector<2x32xf32>
    %314 = math.tanh %313 : vector<2x32xf32>
    %cst_65 = arith.constant 1.000000e+00 : f32
    %315 = vector.broadcast %cst_65 : f32 to vector<2x32xf32>
    %316 = arith.subf %315, %309 : vector<2x32xf32>
    %317 = arith.mulf %316, %314 : vector<2x32xf32>
    %318 = arith.mulf %309, %249 : vector<2x32xf32>
    %319 = arith.addf %317, %318 : vector<2x32xf32>
    %320 = vector.extract_strided_slice %1 {offsets = [0, 3, 0], sizes = [2, 1, 96], strides = [1, 1, 1]} : vector<2x8x96xf32> to vector<2x1x96xf32>
    %321 = vector.shape_cast %320 : vector<2x1x96xf32> to vector<2x96xf32>
    %322 = arith.truncf %281 : vector<2x32xf32> to vector<2x32xbf16>
    %cst_66 = arith.constant dense<0.000000e+00> : vector<2x96xf32>
    %323 = tpu.matmul %322, %3, %cst_66 {dimension_numbers = #tpu.dot_dimension_numbers<[1], [0], [0], [1], [0, 0, 1, 1], [], []>} : vector<2x32xbf16>, vector<32x96xbf16>, vector<2x96xf32> -> vector<2x96xf32>
    %324 = vector.broadcast %5 : vector<1x96xf32> to vector<2x96xf32>
    %325 = arith.addf %323, %324 : vector<2x96xf32>
    %326 = vector.extract_strided_slice %321 {offsets = [0, 0], sizes = [2, 32], strides = [1, 1]} : vector<2x96xf32> to vector<2x32xf32>
    %327 = vector.extract_strided_slice %325 {offsets = [0, 0], sizes = [2, 32], strides = [1, 1]} : vector<2x96xf32> to vector<2x32xf32>
    %328 = arith.addf %326, %327 : vector<2x32xf32>
    %329 = arith.negf %328 : vector<2x32xf32>
    %330 = math.exp %329 : vector<2x32xf32>
    %cst_67 = arith.constant 1.000000e+00 : f32
    %331 = vector.broadcast %cst_67 : f32 to vector<2x32xf32>
    %332 = arith.addf %331, %330 : vector<2x32xf32>
    %333 = arith.divf %331, %332 : vector<2x32xf32>
    %334 = vector.extract_strided_slice %321 {offsets = [0, 32], sizes = [2, 32], strides = [1, 1]} : vector<2x96xf32> to vector<2x32xf32>
    %335 = vector.extract_strided_slice %325 {offsets = [0, 32], sizes = [2, 32], strides = [1, 1]} : vector<2x96xf32> to vector<2x32xf32>
    %336 = arith.addf %334, %335 : vector<2x32xf32>
    %337 = arith.negf %336 : vector<2x32xf32>
    %338 = math.exp %337 : vector<2x32xf32>
    %cst_68 = arith.constant 1.000000e+00 : f32
    %339 = vector.broadcast %cst_68 : f32 to vector<2x32xf32>
    %340 = arith.addf %339, %338 : vector<2x32xf32>
    %341 = arith.divf %339, %340 : vector<2x32xf32>
    %342 = vector.extract_strided_slice %321 {offsets = [0, 64], sizes = [2, 32], strides = [1, 1]} : vector<2x96xf32> to vector<2x32xf32>
    %343 = vector.extract_strided_slice %325 {offsets = [0, 64], sizes = [2, 32], strides = [1, 1]} : vector<2x96xf32> to vector<2x32xf32>
    %344 = arith.mulf %333, %343 : vector<2x32xf32>
    %345 = arith.addf %342, %344 : vector<2x32xf32>
    %346 = math.tanh %345 : vector<2x32xf32>
    %cst_69 = arith.constant 1.000000e+00 : f32
    %347 = vector.broadcast %cst_69 : f32 to vector<2x32xf32>
    %348 = arith.subf %347, %341 : vector<2x32xf32>
    %349 = arith.mulf %348, %346 : vector<2x32xf32>
    %350 = arith.mulf %341, %281 : vector<2x32xf32>
    %351 = arith.addf %349, %350 : vector<2x32xf32>
    %c0_70 = arith.constant 0 : index
    %c4_71 = arith.constant 4 : index
    %c0_72 = arith.constant 0 : index
    %352 = vector.load %arg6[%c0_70, %c4_71, %c0_72] : memref<2x8x64xf32, #tpu.memory_space<vmem>>, vector<2x1x32xf32>
    %353 = vector.shape_cast %352 : vector<2x1x32xf32> to vector<2x32xf32>
    %354 = vector.shape_cast %319 : vector<2x32xf32> to vector<2x1x32xf32>
    tpu.vector_store %arg6[%c0_70, %c4_71, %c0_72], %354 {strides = array<i32>} : memref<2x8x64xf32, #tpu.memory_space<vmem>>, vector<2x1x32xf32>,
    %c0_73 = arith.constant 0 : index
    %c3_74 = arith.constant 3 : index
    %c32_75 = arith.constant 32 : index
    %355 = vector.load %arg6[%c0_73, %c3_74, %c32_75] : memref<2x8x64xf32, #tpu.memory_space<vmem>>, vector<2x1x32xf32>
    %356 = vector.shape_cast %355 : vector<2x1x32xf32> to vector<2x32xf32>
    %357 = vector.shape_cast %351 : vector<2x32xf32> to vector<2x1x32xf32>
    tpu.vector_store %arg6[%c0_73, %c3_74, %c32_75], %357 {strides = array<i32>} : memref<2x8x64xf32, #tpu.memory_space<vmem>>, vector<2x1x32xf32>,
    %358 = vector.extract_strided_slice %0 {offsets = [0, 5, 0], sizes = [2, 1, 96], strides = [1, 1, 1]} : vector<2x8x96xf32> to vector<2x1x96xf32>
    %359 = vector.shape_cast %358 : vector<2x1x96xf32> to vector<2x96xf32>
    %360 = arith.truncf %319 : vector<2x32xf32> to vector<2x32xbf16>
    %cst_76 = arith.constant dense<0.000000e+00> : vector<2x96xf32>
    %361 = tpu.matmul %360, %2, %cst_76 {dimension_numbers = #tpu.dot_dimension_numbers<[1], [0], [0], [1], [0, 0, 1, 1], [], []>} : vector<2x32xbf16>, vector<32x96xbf16>, vector<2x96xf32> -> vector<2x96xf32>
    %362 = vector.broadcast %4 : vector<1x96xf32> to vector<2x96xf32>
    %363 = arith.addf %361, %362 : vector<2x96xf32>
    %364 = vector.extract_strided_slice %359 {offsets = [0, 0], sizes = [2, 32], strides = [1, 1]} : vector<2x96xf32> to vector<2x32xf32>
    %365 = vector.extract_strided_slice %363 {offsets = [0, 0], sizes = [2, 32], strides = [1, 1]} : vector<2x96xf32> to vector<2x32xf32>
    %366 = arith.addf %364, %365 : vector<2x32xf32>
    %367 = arith.negf %366 : vector<2x32xf32>
    %368 = math.exp %367 : vector<2x32xf32>
    %cst_77 = arith.constant 1.000000e+00 : f32
    %369 = vector.broadcast %cst_77 : f32 to vector<2x32xf32>
    %370 = arith.addf %369, %368 : vector<2x32xf32>
    %371 = arith.divf %369, %370 : vector<2x32xf32>
    %372 = vector.extract_strided_slice %359 {offsets = [0, 32], sizes = [2, 32], strides = [1, 1]} : vector<2x96xf32> to vector<2x32xf32>
    %373 = vector.extract_strided_slice %363 {offsets = [0, 32], sizes = [2, 32], strides = [1, 1]} : vector<2x96xf32> to vector<2x32xf32>
    %374 = arith.addf %372, %373 : vector<2x32xf32>
    %375 = arith.negf %374 : vector<2x32xf32>
    %376 = math.exp %375 : vector<2x32xf32>
    %cst_78 = arith.constant 1.000000e+00 : f32
    %377 = vector.broadcast %cst_78 : f32 to vector<2x32xf32>
    %378 = arith.addf %377, %376 : vector<2x32xf32>
    %379 = arith.divf %377, %378 : vector<2x32xf32>
    %380 = vector.extract_strided_slice %359 {offsets = [0, 64], sizes = [2, 32], strides = [1, 1]} : vector<2x96xf32> to vector<2x32xf32>
    %381 = vector.extract_strided_slice %363 {offsets = [0, 64], sizes = [2, 32], strides = [1, 1]} : vector<2x96xf32> to vector<2x32xf32>
    %382 = arith.mulf %371, %381 : vector<2x32xf32>
    %383 = arith.addf %380, %382 : vector<2x32xf32>
    %384 = math.tanh %383 : vector<2x32xf32>
    %cst_79 = arith.constant 1.000000e+00 : f32
    %385 = vector.broadcast %cst_79 : f32 to vector<2x32xf32>
    %386 = arith.subf %385, %379 : vector<2x32xf32>
    %387 = arith.mulf %386, %384 : vector<2x32xf32>
    %388 = arith.mulf %379, %319 : vector<2x32xf32>
    %389 = arith.addf %387, %388 : vector<2x32xf32>
    %390 = vector.extract_strided_slice %1 {offsets = [0, 2, 0], sizes = [2, 1, 96], strides = [1, 1, 1]} : vector<2x8x96xf32> to vector<2x1x96xf32>
    %391 = vector.shape_cast %390 : vector<2x1x96xf32> to vector<2x96xf32>
    %392 = arith.truncf %351 : vector<2x32xf32> to vector<2x32xbf16>
    %cst_80 = arith.constant dense<0.000000e+00> : vector<2x96xf32>
    %393 = tpu.matmul %392, %3, %cst_80 {dimension_numbers = #tpu.dot_dimension_numbers<[1], [0], [0], [1], [0, 0, 1, 1], [], []>} : vector<2x32xbf16>, vector<32x96xbf16>, vector<2x96xf32> -> vector<2x96xf32>
    %394 = vector.broadcast %5 : vector<1x96xf32> to vector<2x96xf32>
    %395 = arith.addf %393, %394 : vector<2x96xf32>
    %396 = vector.extract_strided_slice %391 {offsets = [0, 0], sizes = [2, 32], strides = [1, 1]} : vector<2x96xf32> to vector<2x32xf32>
    %397 = vector.extract_strided_slice %395 {offsets = [0, 0], sizes = [2, 32], strides = [1, 1]} : vector<2x96xf32> to vector<2x32xf32>
    %398 = arith.addf %396, %397 : vector<2x32xf32>
    %399 = arith.negf %398 : vector<2x32xf32>
    %400 = math.exp %399 : vector<2x32xf32>
    %cst_81 = arith.constant 1.000000e+00 : f32
    %401 = vector.broadcast %cst_81 : f32 to vector<2x32xf32>
    %402 = arith.addf %401, %400 : vector<2x32xf32>
    %403 = arith.divf %401, %402 : vector<2x32xf32>
    %404 = vector.extract_strided_slice %391 {offsets = [0, 32], sizes = [2, 32], strides = [1, 1]} : vector<2x96xf32> to vector<2x32xf32>
    %405 = vector.extract_strided_slice %395 {offsets = [0, 32], sizes = [2, 32], strides = [1, 1]} : vector<2x96xf32> to vector<2x32xf32>
    %406 = arith.addf %404, %405 : vector<2x32xf32>
    %407 = arith.negf %406 : vector<2x32xf32>
    %408 = math.exp %407 : vector<2x32xf32>
    %cst_82 = arith.constant 1.000000e+00 : f32
    %409 = vector.broadcast %cst_82 : f32 to vector<2x32xf32>
    %410 = arith.addf %409, %408 : vector<2x32xf32>
    %411 = arith.divf %409, %410 : vector<2x32xf32>
    %412 = vector.extract_strided_slice %391 {offsets = [0, 64], sizes = [2, 32], strides = [1, 1]} : vector<2x96xf32> to vector<2x32xf32>
    %413 = vector.extract_strided_slice %395 {offsets = [0, 64], sizes = [2, 32], strides = [1, 1]} : vector<2x96xf32> to vector<2x32xf32>
    %414 = arith.mulf %403, %413 : vector<2x32xf32>
    %415 = arith.addf %412, %414 : vector<2x32xf32>
    %416 = math.tanh %415 : vector<2x32xf32>
    %cst_83 = arith.constant 1.000000e+00 : f32
    %417 = vector.broadcast %cst_83 : f32 to vector<2x32xf32>
    %418 = arith.subf %417, %411 : vector<2x32xf32>
    %419 = arith.mulf %418, %416 : vector<2x32xf32>
    %420 = arith.mulf %411, %351 : vector<2x32xf32>
    %421 = arith.addf %419, %420 : vector<2x32xf32>
    %c0_84 = arith.constant 0 : index
    %c5_85 = arith.constant 5 : index
    %c0_86 = arith.constant 0 : index
    %422 = vector.load %arg6[%c0_84, %c5_85, %c0_86] : memref<2x8x64xf32, #tpu.memory_space<vmem>>, vector<2x1x32xf32>
    %423 = vector.shape_cast %422 : vector<2x1x32xf32> to vector<2x32xf32>
    %424 = vector.shape_cast %389 : vector<2x32xf32> to vector<2x1x32xf32>
    tpu.vector_store %arg6[%c0_84, %c5_85, %c0_86], %424 {strides = array<i32>} : memref<2x8x64xf32, #tpu.memory_space<vmem>>, vector<2x1x32xf32>,
    %c0_87 = arith.constant 0 : index
    %c2_88 = arith.constant 2 : index
    %c32_89 = arith.constant 32 : index
    %425 = vector.load %arg6[%c0_87, %c2_88, %c32_89] : memref<2x8x64xf32, #tpu.memory_space<vmem>>, vector<2x1x32xf32>
    %426 = vector.shape_cast %425 : vector<2x1x32xf32> to vector<2x32xf32>
    %427 = vector.shape_cast %421 : vector<2x32xf32> to vector<2x1x32xf32>
    tpu.vector_store %arg6[%c0_87, %c2_88, %c32_89], %427 {strides = array<i32>} : memref<2x8x64xf32, #tpu.memory_space<vmem>>, vector<2x1x32xf32>,
    %428 = vector.extract_strided_slice %0 {offsets = [0, 6, 0], sizes = [2, 1, 96], strides = [1, 1, 1]} : vector<2x8x96xf32> to vector<2x1x96xf32>
    %429 = vector.shape_cast %428 : vector<2x1x96xf32> to vector<2x96xf32>
    %430 = arith.truncf %389 : vector<2x32xf32> to vector<2x32xbf16>
    %cst_90 = arith.constant dense<0.000000e+00> : vector<2x96xf32>
    %431 = tpu.matmul %430, %2, %cst_90 {dimension_numbers = #tpu.dot_dimension_numbers<[1], [0], [0], [1], [0, 0, 1, 1], [], []>} : vector<2x32xbf16>, vector<32x96xbf16>, vector<2x96xf32> -> vector<2x96xf32>
    %432 = vector.broadcast %4 : vector<1x96xf32> to vector<2x96xf32>
    %433 = arith.addf %431, %432 : vector<2x96xf32>
    %434 = vector.extract_strided_slice %429 {offsets = [0, 0], sizes = [2, 32], strides = [1, 1]} : vector<2x96xf32> to vector<2x32xf32>
    %435 = vector.extract_strided_slice %433 {offsets = [0, 0], sizes = [2, 32], strides = [1, 1]} : vector<2x96xf32> to vector<2x32xf32>
    %436 = arith.addf %434, %435 : vector<2x32xf32>
    %437 = arith.negf %436 : vector<2x32xf32>
    %438 = math.exp %437 : vector<2x32xf32>
    %cst_91 = arith.constant 1.000000e+00 : f32
    %439 = vector.broadcast %cst_91 : f32 to vector<2x32xf32>
    %440 = arith.addf %439, %438 : vector<2x32xf32>
    %441 = arith.divf %439, %440 : vector<2x32xf32>
    %442 = vector.extract_strided_slice %429 {offsets = [0, 32], sizes = [2, 32], strides = [1, 1]} : vector<2x96xf32> to vector<2x32xf32>
    %443 = vector.extract_strided_slice %433 {offsets = [0, 32], sizes = [2, 32], strides = [1, 1]} : vector<2x96xf32> to vector<2x32xf32>
    %444 = arith.addf %442, %443 : vector<2x32xf32>
    %445 = arith.negf %444 : vector<2x32xf32>
    %446 = math.exp %445 : vector<2x32xf32>
    %cst_92 = arith.constant 1.000000e+00 : f32
    %447 = vector.broadcast %cst_92 : f32 to vector<2x32xf32>
    %448 = arith.addf %447, %446 : vector<2x32xf32>
    %449 = arith.divf %447, %448 : vector<2x32xf32>
    %450 = vector.extract_strided_slice %429 {offsets = [0, 64], sizes = [2, 32], strides = [1, 1]} : vector<2x96xf32> to vector<2x32xf32>
    %451 = vector.extract_strided_slice %433 {offsets = [0, 64], sizes = [2, 32], strides = [1, 1]} : vector<2x96xf32> to vector<2x32xf32>
    %452 = arith.mulf %441, %451 : vector<2x32xf32>
    %453 = arith.addf %450, %452 : vector<2x32xf32>
    %454 = math.tanh %453 : vector<2x32xf32>
    %cst_93 = arith.constant 1.000000e+00 : f32
    %455 = vector.broadcast %cst_93 : f32 to vector<2x32xf32>
    %456 = arith.subf %455, %449 : vector<2x32xf32>
    %457 = arith.mulf %456, %454 : vector<2x32xf32>
    %458 = arith.mulf %449, %389 : vector<2x32xf32>
    %459 = arith.addf %457, %458 : vector<2x32xf32>
    %460 = vector.extract_strided_slice %1 {offsets = [0, 1, 0], sizes = [2, 1, 96], strides = [1, 1, 1]} : vector<2x8x96xf32> to vector<2x1x96xf32>
    %461 = vector.shape_cast %460 : vector<2x1x96xf32> to vector<2x96xf32>
    %462 = arith.truncf %421 : vector<2x32xf32> to vector<2x32xbf16>
    %cst_94 = arith.constant dense<0.000000e+00> : vector<2x96xf32>
    %463 = tpu.matmul %462, %3, %cst_94 {dimension_numbers = #tpu.dot_dimension_numbers<[1], [0], [0], [1], [0, 0, 1, 1], [], []>} : vector<2x32xbf16>, vector<32x96xbf16>, vector<2x96xf32> -> vector<2x96xf32>
    %464 = vector.broadcast %5 : vector<1x96xf32> to vector<2x96xf32>
    %465 = arith.addf %463, %464 : vector<2x96xf32>
    %466 = vector.extract_strided_slice %461 {offsets = [0, 0], sizes = [2, 32], strides = [1, 1]} : vector<2x96xf32> to vector<2x32xf32>
    %467 = vector.extract_strided_slice %465 {offsets = [0, 0], sizes = [2, 32], strides = [1, 1]} : vector<2x96xf32> to vector<2x32xf32>
    %468 = arith.addf %466, %467 : vector<2x32xf32>
    %469 = arith.negf %468 : vector<2x32xf32>
    %470 = math.exp %469 : vector<2x32xf32>
    %cst_95 = arith.constant 1.000000e+00 : f32
    %471 = vector.broadcast %cst_95 : f32 to vector<2x32xf32>
    %472 = arith.addf %471, %470 : vector<2x32xf32>
    %473 = arith.divf %471, %472 : vector<2x32xf32>
    %474 = vector.extract_strided_slice %461 {offsets = [0, 32], sizes = [2, 32], strides = [1, 1]} : vector<2x96xf32> to vector<2x32xf32>
    %475 = vector.extract_strided_slice %465 {offsets = [0, 32], sizes = [2, 32], strides = [1, 1]} : vector<2x96xf32> to vector<2x32xf32>
    %476 = arith.addf %474, %475 : vector<2x32xf32>
    %477 = arith.negf %476 : vector<2x32xf32>
    %478 = math.exp %477 : vector<2x32xf32>
    %cst_96 = arith.constant 1.000000e+00 : f32
    %479 = vector.broadcast %cst_96 : f32 to vector<2x32xf32>
    %480 = arith.addf %479, %478 : vector<2x32xf32>
    %481 = arith.divf %479, %480 : vector<2x32xf32>
    %482 = vector.extract_strided_slice %461 {offsets = [0, 64], sizes = [2, 32], strides = [1, 1]} : vector<2x96xf32> to vector<2x32xf32>
    %483 = vector.extract_strided_slice %465 {offsets = [0, 64], sizes = [2, 32], strides = [1, 1]} : vector<2x96xf32> to vector<2x32xf32>
    %484 = arith.mulf %473, %483 : vector<2x32xf32>
    %485 = arith.addf %482, %484 : vector<2x32xf32>
    %486 = math.tanh %485 : vector<2x32xf32>
    %cst_97 = arith.constant 1.000000e+00 : f32
    %487 = vector.broadcast %cst_97 : f32 to vector<2x32xf32>
    %488 = arith.subf %487, %481 : vector<2x32xf32>
    %489 = arith.mulf %488, %486 : vector<2x32xf32>
    %490 = arith.mulf %481, %421 : vector<2x32xf32>
    %491 = arith.addf %489, %490 : vector<2x32xf32>
    %c0_98 = arith.constant 0 : index
    %c6_99 = arith.constant 6 : index
    %c0_100 = arith.constant 0 : index
    %492 = vector.load %arg6[%c0_98, %c6_99, %c0_100] : memref<2x8x64xf32, #tpu.memory_space<vmem>>, vector<2x1x32xf32>
    %493 = vector.shape_cast %492 : vector<2x1x32xf32> to vector<2x32xf32>
    %494 = vector.shape_cast %459 : vector<2x32xf32> to vector<2x1x32xf32>
    tpu.vector_store %arg6[%c0_98, %c6_99, %c0_100], %494 {strides = array<i32>} : memref<2x8x64xf32, #tpu.memory_space<vmem>>, vector<2x1x32xf32>,
    %c0_101 = arith.constant 0 : index
    %c1_102 = arith.constant 1 : index
    %c32_103 = arith.constant 32 : index
    %495 = vector.load %arg6[%c0_101, %c1_102, %c32_103] : memref<2x8x64xf32, #tpu.memory_space<vmem>>, vector<2x1x32xf32>
    %496 = vector.shape_cast %495 : vector<2x1x32xf32> to vector<2x32xf32>
    %497 = vector.shape_cast %491 : vector<2x32xf32> to vector<2x1x32xf32>
    tpu.vector_store %arg6[%c0_101, %c1_102, %c32_103], %497 {strides = array<i32>} : memref<2x8x64xf32, #tpu.memory_space<vmem>>, vector<2x1x32xf32>,
    %498 = vector.extract_strided_slice %0 {offsets = [0, 7, 0], sizes = [2, 1, 96], strides = [1, 1, 1]} : vector<2x8x96xf32> to vector<2x1x96xf32>
    %499 = vector.shape_cast %498 : vector<2x1x96xf32> to vector<2x96xf32>
    %500 = arith.truncf %459 : vector<2x32xf32> to vector<2x32xbf16>
    %cst_104 = arith.constant dense<0.000000e+00> : vector<2x96xf32>
    %501 = tpu.matmul %500, %2, %cst_104 {dimension_numbers = #tpu.dot_dimension_numbers<[1], [0], [0], [1], [0, 0, 1, 1], [], []>} : vector<2x32xbf16>, vector<32x96xbf16>, vector<2x96xf32> -> vector<2x96xf32>
    %502 = vector.broadcast %4 : vector<1x96xf32> to vector<2x96xf32>
    %503 = arith.addf %501, %502 : vector<2x96xf32>
    %504 = vector.extract_strided_slice %499 {offsets = [0, 0], sizes = [2, 32], strides = [1, 1]} : vector<2x96xf32> to vector<2x32xf32>
    %505 = vector.extract_strided_slice %503 {offsets = [0, 0], sizes = [2, 32], strides = [1, 1]} : vector<2x96xf32> to vector<2x32xf32>
    %506 = arith.addf %504, %505 : vector<2x32xf32>
    %507 = arith.negf %506 : vector<2x32xf32>
    %508 = math.exp %507 : vector<2x32xf32>
    %cst_105 = arith.constant 1.000000e+00 : f32
    %509 = vector.broadcast %cst_105 : f32 to vector<2x32xf32>
    %510 = arith.addf %509, %508 : vector<2x32xf32>
    %511 = arith.divf %509, %510 : vector<2x32xf32>
    %512 = vector.extract_strided_slice %499 {offsets = [0, 32], sizes = [2, 32], strides = [1, 1]} : vector<2x96xf32> to vector<2x32xf32>
    %513 = vector.extract_strided_slice %503 {offsets = [0, 32], sizes = [2, 32], strides = [1, 1]} : vector<2x96xf32> to vector<2x32xf32>
    %514 = arith.addf %512, %513 : vector<2x32xf32>
    %515 = arith.negf %514 : vector<2x32xf32>
    %516 = math.exp %515 : vector<2x32xf32>
    %cst_106 = arith.constant 1.000000e+00 : f32
    %517 = vector.broadcast %cst_106 : f32 to vector<2x32xf32>
    %518 = arith.addf %517, %516 : vector<2x32xf32>
    %519 = arith.divf %517, %518 : vector<2x32xf32>
    %520 = vector.extract_strided_slice %499 {offsets = [0, 64], sizes = [2, 32], strides = [1, 1]} : vector<2x96xf32> to vector<2x32xf32>
    %521 = vector.extract_strided_slice %503 {offsets = [0, 64], sizes = [2, 32], strides = [1, 1]} : vector<2x96xf32> to vector<2x32xf32>
    %522 = arith.mulf %511, %521 : vector<2x32xf32>
    %523 = arith.addf %520, %522 : vector<2x32xf32>
    %524 = math.tanh %523 : vector<2x32xf32>
    %cst_107 = arith.constant 1.000000e+00 : f32
    %525 = vector.broadcast %cst_107 : f32 to vector<2x32xf32>
    %526 = arith.subf %525, %519 : vector<2x32xf32>
    %527 = arith.mulf %526, %524 : vector<2x32xf32>
    %528 = arith.mulf %519, %459 : vector<2x32xf32>
    %529 = arith.addf %527, %528 : vector<2x32xf32>
    %530 = vector.extract_strided_slice %1 {offsets = [0, 0, 0], sizes = [2, 1, 96], strides = [1, 1, 1]} : vector<2x8x96xf32> to vector<2x1x96xf32>
    %531 = vector.shape_cast %530 : vector<2x1x96xf32> to vector<2x96xf32>
    %532 = arith.truncf %491 : vector<2x32xf32> to vector<2x32xbf16>
    %cst_108 = arith.constant dense<0.000000e+00> : vector<2x96xf32>
    %533 = tpu.matmul %532, %3, %cst_108 {dimension_numbers = #tpu.dot_dimension_numbers<[1], [0], [0], [1], [0, 0, 1, 1], [], []>} : vector<2x32xbf16>, vector<32x96xbf16>, vector<2x96xf32> -> vector<2x96xf32>
    %534 = vector.broadcast %5 : vector<1x96xf32> to vector<2x96xf32>
    %535 = arith.addf %533, %534 : vector<2x96xf32>
    %536 = vector.extract_strided_slice %531 {offsets = [0, 0], sizes = [2, 32], strides = [1, 1]} : vector<2x96xf32> to vector<2x32xf32>
    %537 = vector.extract_strided_slice %535 {offsets = [0, 0], sizes = [2, 32], strides = [1, 1]} : vector<2x96xf32> to vector<2x32xf32>
    %538 = arith.addf %536, %537 : vector<2x32xf32>
    %539 = arith.negf %538 : vector<2x32xf32>
    %540 = math.exp %539 : vector<2x32xf32>
    %cst_109 = arith.constant 1.000000e+00 : f32
    %541 = vector.broadcast %cst_109 : f32 to vector<2x32xf32>
    %542 = arith.addf %541, %540 : vector<2x32xf32>
    %543 = arith.divf %541, %542 : vector<2x32xf32>
    %544 = vector.extract_strided_slice %531 {offsets = [0, 32], sizes = [2, 32], strides = [1, 1]} : vector<2x96xf32> to vector<2x32xf32>
    %545 = vector.extract_strided_slice %535 {offsets = [0, 32], sizes = [2, 32], strides = [1, 1]} : vector<2x96xf32> to vector<2x32xf32>
    %546 = arith.addf %544, %545 : vector<2x32xf32>
    %547 = arith.negf %546 : vector<2x32xf32>
    %548 = math.exp %547 : vector<2x32xf32>
    %cst_110 = arith.constant 1.000000e+00 : f32
    %549 = vector.broadcast %cst_110 : f32 to vector<2x32xf32>
    %550 = arith.addf %549, %548 : vector<2x32xf32>
    %551 = arith.divf %549, %550 : vector<2x32xf32>
    %552 = vector.extract_strided_slice %531 {offsets = [0, 64], sizes = [2, 32], strides = [1, 1]} : vector<2x96xf32> to vector<2x32xf32>
    %553 = vector.extract_strided_slice %535 {offsets = [0, 64], sizes = [2, 32], strides = [1, 1]} : vector<2x96xf32> to vector<2x32xf32>
    %554 = arith.mulf %543, %553 : vector<2x32xf32>
    %555 = arith.addf %552, %554 : vector<2x32xf32>
    %556 = math.tanh %555 : vector<2x32xf32>
    %cst_111 = arith.constant 1.000000e+00 : f32
    %557 = vector.broadcast %cst_111 : f32 to vector<2x32xf32>
    %558 = arith.subf %557, %551 : vector<2x32xf32>
    %559 = arith.mulf %558, %556 : vector<2x32xf32>
    %560 = arith.mulf %551, %491 : vector<2x32xf32>
    %561 = arith.addf %559, %560 : vector<2x32xf32>
    %c0_112 = arith.constant 0 : index
    %c7_113 = arith.constant 7 : index
    %c0_114 = arith.constant 0 : index
    %562 = vector.load %arg6[%c0_112, %c7_113, %c0_114] : memref<2x8x64xf32, #tpu.memory_space<vmem>>, vector<2x1x32xf32>
    %563 = vector.shape_cast %562 : vector<2x1x32xf32> to vector<2x32xf32>
    %564 = vector.shape_cast %529 : vector<2x32xf32> to vector<2x1x32xf32>
    tpu.vector_store %arg6[%c0_112, %c7_113, %c0_114], %564 {strides = array<i32>} : memref<2x8x64xf32, #tpu.memory_space<vmem>>, vector<2x1x32xf32>,
    %c0_115 = arith.constant 0 : index
    %c0_116 = arith.constant 0 : index
    %c32_117 = arith.constant 32 : index
    %565 = vector.load %arg6[%c0_115, %c0_116, %c32_117] : memref<2x8x64xf32, #tpu.memory_space<vmem>>, vector<2x1x32xf32>
    %566 = vector.shape_cast %565 : vector<2x1x32xf32> to vector<2x32xf32>
    %567 = vector.shape_cast %561 : vector<2x32xf32> to vector<2x1x32xf32>
    tpu.vector_store %arg6[%c0_115, %c0_116, %c32_117], %567 {strides = array<i32>} : memref<2x8x64xf32, #tpu.memory_space<vmem>>, vector<2x1x32xf32>,
    return
  }
}

</mosaic_0001>

<llo_original>
// kernel: uni_trans_gru_forward.3
$region0: #{uni_trans_gru_forward.3}
  #allocation0 [shape = 'u32[]', space=smem, size = 0x4, offset = 0x4, fixed_abs, tag = 'smem constant byte address 0x4 - core index']
  #allocation1 [shape = 'u32[144,128]{1,0:T(1,128)}', space=vmem, size = 0x12000, scoped, tag = 'internal scratch']
  %s0 = inlined_call_operand.vmem [shape: f32[16,64], index: 0, kind: input, shape index: {}]
  %s1 = inlined_call_operand.vmem [shape: bf16[64,42], index: 1, kind: input, shape index: {}]
  %s2 = inlined_call_operand.vmem [shape: f32[1,42], index: 2, kind: input, shape index: {}]
  %s3 = inlined_call_operand.vmem [shape: f32[16,18], index: 3, kind: output, shape index: {}]
  %s4 = sld [smem:[#allocation0]]
  $region22: #{uni_trans_gru_forward.3} parent=0
    _
  %s6 = ssub.s32 1, %s4
  %s7 = scalar_select 0, %s6, %s4
  // Predicated region
  $region2: #{uni_trans_gru_forward.3} parent=0 // pred_check
    _
  $region3: #{uni_trans_gru_forward.3} parent=0 // pred_check_branch
    %9 = sbr.rel (0) target = $region5
  $region4: #{uni_trans_gru_forward.3} parent=0 // pred_region
    _
  $region5: #{uni_trans_gru_forward.3} parent=0 // pred_fallthru
    _
  // Predicated region
  $region6: #{uni_trans_gru_forward.3} parent=0 // pred_check
    _
  $region7: #{uni_trans_gru_forward.3} parent=0 // pred_check_branch
    %11 = sbr.rel (0) target = $region9
  $region8: #{uni_trans_gru_forward.3} parent=0 // pred_region
    _
  $region9: #{uni_trans_gru_forward.3} parent=0 // pred_fallthru
    _
  // Predicated region
  $region10: #{uni_trans_gru_forward.3} parent=0 // pred_check
    _
  $region11: #{uni_trans_gru_forward.3} parent=0 // pred_check_branch
    %13 = sbr.rel (0) target = $region13
  $region12: #{uni_trans_gru_forward.3} parent=0 // pred_region
    _
  $region13: #{uni_trans_gru_forward.3} parent=0 // pred_fallthru
    _
  %v15 = vld [vmem:[%s0] sm:$0xff]
  %v16 = vld [vmem:[%s0 + $0x8] sm:$0xff]
  %v17 = vpack.c.bf16 %v16, %v15
  %v18 = vld [vmem:[%s1] sm:$0xf]
  %v19 = vld [vmem:[%s1 + $0x4] sm:$0xf]
  %v20 = vld [vmem:[%s1 + $0x8] sm:$0xf]
  %v21 = vld [vmem:[%s1 + $0xc] sm:$0xf]
  %v22 = vld [vmem:[%s1 + $0x10] sm:$0xf]
  %v23 = vld [vmem:[%s1 + $0x14] sm:$0xf]
  %v24 = vld [vmem:[%s1 + $0x18] sm:$0xf]
  %v25 = vld [vmem:[%s1 + $0x1c] sm:$0xf]
  %v26 = vld [vmem:[%s2] sm:$0x1]
  %v28 = vlaneseq
  %v29 = vshrl.u32 %v28, 7
  %v30 = vsub.s32 0, %v29
  %v31 = vrot.slane %v26, %v30
  %v41 = vunpack.c.l.b16 %v18
  %v42 = vunpack.c.l.b16 %v19
  %v43 = vunpack.c.l.b16 %v20
  %v44 = vunpack.c.l.b16 %v21
  %v45 = vunpack.c.l.b16 %v22
  %v46 = vunpack.c.l.b16 %v23
  %v47 = vunpack.c.l.b16 %v24
  %v48 = vunpack.c.l.b16 %v25
  %v49 = vpack.c.b16 %v42, %v41
  %v50 = vpack.c.b16 %v44, %v43
  %v51 = vpack.c.b16 %v46, %v45
  %v52 = vpack.c.b16 %v48, %v47
  %vm57 = vcmask 523264
  %v59 = vsel %vm57, %v17, 0
  %61 = vmatprep.subr.bf16.mxu0 0
  %62 = vmatpush1.bf16.msra.mxu0 %v49
  %63 = vmatprep.subr.bf16.mxu0 0
  %64 = vmatpush1.bf16.msra.mxu0 %v50
  %65 = vmatprep.subr.bf16.mxu0 0
  %66 = vmatpush1.bf16.msra.mxu0 %v51
  %67 = vmatprep.subr.bf16.mxu0 0
  %68 = vmatpush1.bf16.msra.mxu0 %v52
  %69 = vmatprep.subr.bf16.mxu0 0
  %70 = vmatpush1.bf16.msra.mxu0 0
  %71 = vmatprep.subr.bf16.mxu0 0
  %72 = vmatpush1.bf16.msra.mxu0 0
  %73 = vmatprep.subr.bf16.mxu0 0
  %74 = vmatpush1.bf16.msra.mxu0 0
  %75 = vmatprep.subr.bf16.mxu0 0
  %76 = vmatpush1.bf16.msra.mxu0 0
  %77 = vmatprep.subr.bf16.mxu0 0
  %78 = vmatpush1.bf16.msra.mxu0 0
  %79 = vmatprep.subr.bf16.mxu0 0
  %80 = vmatpush1.bf16.msra.mxu0 0
  %81 = vmatprep.subr.bf16.mxu0 0
  %82 = vmatpush1.bf16.msra.mxu0 0
  %83 = vmatprep.subr.bf16.mxu0 0
  %84 = vmatpush1.bf16.msra.mxu0 0
  %85 = vmatprep.subr.bf16.mxu0 0
  %86 = vmatpush1.bf16.msra.mxu0 0
  %87 = vmatprep.subr.bf16.mxu0 0
  %88 = vmatpush1.bf16.msra.mxu0 0
  %89 = vmatprep.subr.bf16.mxu0 0
  %90 = vmatpush1.bf16.msra.mxu0 0
  %91 = vmatprep.subr.bf16.mxu0 0
  %92 = vmatpush1.bf16.msra.mxu0 0
  %93 = vmatprep.mubr.bf16.mxu0 0
  %94 = vmatmul.mubr.bf16.gmra.mrb[0].mxu0 %v59
  %v95 = vpop.f32.mrb[0].mxu0
  %v96 = vadd.f32 %v31, %v95
  %v97 = vpop.f32.mrb[0].mxu0
  %v98 = vpop.f32.mrb[0].mxu0
  %v99 = vadd.f32 %v31, %v98
  %v100 = vpop.f32.mrb[0].mxu0
  %101 = vdwg.mxu0
  %104 = vrot.lane.b32.xlu0 %v96, 32
  %v105 = vpop.permute.xlu0 %104
  %106 = vrot.lane.b32.xlu0 %v99, 32
  %v107 = vpop.permute.xlu0 %106
  %v110 = vmul.f32 %v96, %v105
  %v111 = vmul.f32 %v99, %v107
  %114 = vrot.lane.b32.xlu0 %v110, 96
  %v115 = vpop.permute.xlu0 %114
  %116 = vrot.lane.b32.xlu0 %v111, 96
  %v117 = vpop.permute.xlu0 %116
  %vm120 = vcmask 31744
  %v121 = vsel %vm120, %v115, 0.0
  %122 = vadd.xlane.f32.xlu0 %v121
  %v123 = vpop.xlane.xlu0 %122
  %v124 = vsel %vm120, %v117, 0.0
  %125 = vadd.xlane.f32.xlu0 %v124
  %v126 = vpop.xlane.xlu0 %125
  %v127 = vmul.f32 %v96, %v123
  %v128 = vmul.f32 %v99, %v126
  %131 = vrot.lane.b32.xlu0 %v127, 114
  %v132 = vpop.permute.xlu0 %131
  %133 = vrot.lane.b32.xlu0 %v128, 114
  %v134 = vpop.permute.xlu0 %133
  %v137 = vadd.f32 %v96, %v132
  %v138 = vadd.f32 %v99, %v134
  %139 = vrot.lane.b32.xlu0 %v110, 92
  %v140 = vpop.permute.xlu0 %139
  %141 = vrot.lane.b32.xlu0 %v111, 92
  %v142 = vpop.permute.xlu0 %141
  %vm145 = vcmask 48128
  %v146 = vsel %vm145, %v140, 0.0
  %147 = vadd.xlane.f32.xlu0 %v146
  %v148 = vpop.xlane.xlu0 %147
  %v149 = vsel %vm145, %v142, 0.0
  %150 = vadd.xlane.f32.xlu0 %v149
  %v151 = vpop.xlane.xlu0 %150
  %v152 = vmul.f32 %v96, %v148
  %v153 = vmul.f32 %v99, %v151
  %156 = vrot.lane.b32.xlu0 %v152, 114
  %v157 = vpop.permute.xlu0 %156
  %158 = vrot.lane.b32.xlu0 %v153, 114
  %v159 = vpop.permute.xlu0 %158
  %v162 = vadd.f32 %v96, %v157
  %v163 = vadd.f32 %v99, %v159
  %164 = vst.msk [vmem:[%s3] sm:$0xff] %vm120, %v96
  %165 = vst.msk [vmem:[%s3 + $0x8] sm:$0xff] %vm120, %v99
  %vm166 = vcmask 80928
  %167 = vst.msk [vmem:[%s3] sm:$0xff] %vm166, %v137
  %168 = vst.msk [vmem:[%s3 + $0x8] sm:$0xff] %vm166, %v138
  %vm169 = vcmask 146512
  %170 = vst.msk [vmem:[%s3] sm:$0xff] %vm169, %v162
  %171 = vst.msk [vmem:[%s3 + $0x8] sm:$0xff] %vm169, %v163
  // Predicated region
  $region14: #{uni_trans_gru_forward.3} parent=0 // pred_check
    _
  $region15: #{uni_trans_gru_forward.3} parent=0 // pred_check_branch
    %173 = sbr.rel (0) target = $region17
  $region16: #{uni_trans_gru_forward.3} parent=0 // pred_region
    _
  $region17: #{uni_trans_gru_forward.3} parent=0 // pred_fallthru
    _
  // Predicated region
  $region18: #{uni_trans_gru_forward.3} parent=0 // pred_check
    _
  $region19: #{uni_trans_gru_forward.3} parent=0 // pred_check_branch
    %175 = sbr.rel (0) target = $region21
  $region20: #{uni_trans_gru_forward.3} parent=0 // pred_region
    _
  $region21: #{uni_trans_gru_forward.3} parent=0 // pred_fallthru
    _

// kernel: uni_trans_gru_forward.2
$region0: #{uni_trans_gru_forward.2}
  #allocation0 [shape = 'u32[]', space=smem, size = 0x4, offset = 0x4, fixed_abs, tag = 'smem constant byte address 0x4 - core index']
  #allocation1 [shape = 'u32[144,128]{1,0:T(1,128)}', space=vmem, size = 0x12000, scoped, tag = 'internal scratch']
  %s0 = inlined_call_operand.vmem [shape: f32[2,8,96], index: 0, kind: input, shape index: {}]
  %s1 = inlined_call_operand.vmem [shape: f32[2,8,96], index: 1, kind: input, shape index: {}]
  %s2 = inlined_call_operand.vmem [shape: bf16[32,96], index: 2, kind: input, shape index: {}]
  %s3 = inlined_call_operand.vmem [shape: bf16[32,96], index: 3, kind: input, shape index: {}]
  %s4 = inlined_call_operand.vmem [shape: f32[1,96], index: 4, kind: input, shape index: {}]
  %s5 = inlined_call_operand.vmem [shape: f32[1,96], index: 5, kind: input, shape index: {}]
  %s6 = inlined_call_operand.vmem [shape: f32[2,8,64], index: 6, kind: output, shape index: {}]
  %s7 = sld [smem:[#allocation0]]
  $region34: #{uni_trans_gru_forward.2} parent=0
    _
  %s9 = ssub.s32 1, %s7
  %s10 = scalar_select 0, %s9, %s7
  // Predicated region
  $region2: #{uni_trans_gru_forward.2} parent=0 // pred_check
    _
  $region3: #{uni_trans_gru_forward.2} parent=0 // pred_check_branch
    %12 = sbr.rel (0) target = $region5
  $region4: #{uni_trans_gru_forward.2} parent=0 // pred_region
    _
  $region5: #{uni_trans_gru_forward.2} parent=0 // pred_fallthru
    _
  // Predicated region
  $region6: #{uni_trans_gru_forward.2} parent=0 // pred_check
    _
  $region7: #{uni_trans_gru_forward.2} parent=0 // pred_check_branch
    %14 = sbr.rel (0) target = $region9
  $region8: #{uni_trans_gru_forward.2} parent=0 // pred_region
    _
  $region9: #{uni_trans_gru_forward.2} parent=0 // pred_fallthru
    _
  // Predicated region
  $region10: #{uni_trans_gru_forward.2} parent=0 // pred_check
    _
  $region11: #{uni_trans_gru_forward.2} parent=0 // pred_check_branch
    %16 = sbr.rel (0) target = $region13
  $region12: #{uni_trans_gru_forward.2} parent=0 // pred_region
    _
  $region13: #{uni_trans_gru_forward.2} parent=0 // pred_fallthru
    _
  // Predicated region
  $region14: #{uni_trans_gru_forward.2} parent=0 // pred_check
    _
  $region15: #{uni_trans_gru_forward.2} parent=0 // pred_check_branch
    %18 = sbr.rel (0) target = $region17
  $region16: #{uni_trans_gru_forward.2} parent=0 // pred_region
    _
  $region17: #{uni_trans_gru_forward.2} parent=0 // pred_fallthru
    _
  // Predicated region
  $region18: #{uni_trans_gru_forward.2} parent=0 // pred_check
    _
  $region19: #{uni_trans_gru_forward.2} parent=0 // pred_check_branch
    %20 = sbr.rel (0) target = $region21
  $region20: #{uni_trans_gru_forward.2} parent=0 // pred_region
    _
  $region21: #{uni_trans_gru_forward.2} parent=0 // pred_fallthru
    _
  // Predicated region
  $region22: #{uni_trans_gru_forward.2} parent=0 // pred_check
    _
  $region23: #{uni_trans_gru_forward.2} parent=0 // pred_check_branch
    %22 = sbr.rel (0) target = $region25
  $region24: #{uni_trans_gru_forward.2} parent=0 // pred_region
    _
  $region25: #{uni_trans_gru_forward.2} parent=0 // pred_fallthru
    _
  %v24 = vld [vmem:[%s0] sm:$0xff]
  %v25 = vld [vmem:[%s0 + $0x8] sm:$0xff]
  %v26 = vld [vmem:[%s1] sm:$0xff]
  %v27 = vld [vmem:[%s1 + $0x8] sm:$0xff]
  %v28 = vld [vmem:[%s2] sm:$0xf]
  %v29 = vld [vmem:[%s2 + $0x4] sm:$0xf]
  %v30 = vld [vmem:[%s2 + $0x8] sm:$0xf]
  %v31 = vld [vmem:[%s2 + $0xc] sm:$0xf]
  %v32 = vld [vmem:[%s3] sm:$0xf]
  %v33 = vld [vmem:[%s3 + $0x4] sm:$0xf]
  %v34 = vld [vmem:[%s3 + $0x8] sm:$0xf]
  %v35 = vld [vmem:[%s3 + $0xc] sm:$0xf]
  %v36 = vld [vmem:[%s4] sm:$0x1]
  %v37 = vld [vmem:[%s5] sm:$0x1]
  %v39 = vlaneseq
  %v40 = vshrl.u32 %v39, 7
  %v41 = vsub.s32 0, %v40
  %v42 = vrot.slane %v36, %v41
  %v48 = vunpack.c.l.b16 %v28
  %v49 = vunpack.c.l.b16 %v29
  %v50 = vunpack.c.l.b16 %v30
  %v51 = vunpack.c.l.b16 %v31
  %v52 = vpack.c.b16 %v49, %v48
  %v53 = vpack.c.b16 %v51, %v50
  %vm56 = vcmask 261120
  %v58 = vsel %vm56, 0, 0
  %60 = vmatprep.subr.bf16.mxu0 0
  %61 = vmatpush1.bf16.msra.mxu0 %v52
  %62 = vmatprep.subr.bf16.mxu0 0
  %63 = vmatpush1.bf16.msra.mxu0 %v53
  %64 = vmatprep.subr.bf16.mxu0 0
  %65 = vmatpush1.bf16.msra.mxu0 0
  %66 = vmatprep.subr.bf16.mxu0 0
  %67 = vmatpush1.bf16.msra.mxu0 0
  %68 = vmatprep.subr.bf16.mxu0 0
  %69 = vmatpush1.bf16.msra.mxu0 0
  %70 = vmatprep.subr.bf16.mxu0 0
  %71 = vmatpush1.bf16.msra.mxu0 0
  %72 = vmatprep.subr.bf16.mxu0 0
  %73 = vmatpush1.bf16.msra.mxu0 0
  %74 = vmatprep.subr.bf16.mxu0 0
  %75 = vmatpush1.bf16.msra.mxu0 0
  %76 = vmatprep.subr.bf16.mxu0 0
  %77 = vmatpush1.bf16.msra.mxu0 0
  %78 = vmatprep.subr.bf16.mxu0 0
  %79 = vmatpush1.bf16.msra.mxu0 0
  %80 = vmatprep.subr.bf16.mxu0 0
  %81 = vmatpush1.bf16.msra.mxu0 0
  %82 = vmatprep.subr.bf16.mxu0 0
  %83 = vmatpush1.bf16.msra.mxu0 0
  %84 = vmatprep.subr.bf16.mxu0 0
  %85 = vmatpush1.bf16.msra.mxu0 0
  %86 = vmatprep.subr.bf16.mxu0 0
  %87 = vmatpush1.bf16.msra.mxu0 0
  %88 = vmatprep.subr.bf16.mxu0 0
  %89 = vmatpush1.bf16.msra.mxu0 0
  %90 = vmatprep.subr.bf16.mxu0 0
  %91 = vmatpush1.bf16.msra.mxu0 0
  %92 = vmatprep.mubr.bf16.mxu0 0
  %93 = vmatmul.mubr.bf16.gmra.mrb[0].mxu0 %v58
  %v94 = vpop.f32.mrb[0].mxu0
  %v95 = vadd.f32 %v42, %v94
  %v96 = vpop.f32.mrb[0].mxu0
  %v97 = vpop.f32.mrb[0].mxu0
  %v98 = vpop.f32.mrb[0].mxu0
  %99 = vdwg.mxu0
  %v101 = vrot.slane %v95, 1
  %v104 = vadd.f32 %v24, %v95
  %v105 = vadd.f32 %v25, %v101
  %v106 = vxor.u32 %v104, 2147483648
  %v107 = vxor.u32 %v105, 2147483648
  %v108 = vmul.f32 %v106, 1.442695
  %v109 = vpow.pop %v108
  %v110 = vmul.f32 %v107, 1.442695
  %v111 = vpow.pop %v110
  %v112 = vadd.f32 %v109, 1.0
  %v113 = vadd.f32 %v111, 1.0
  %v114 = vrcp.pop %v112
  %v115 = vmul.f32 1.0, %v114
  %v116 = vrcp.pop %v113
  %v117 = vmul.f32 1.0, %v116
  %118 = vrot.lane.b32.xlu0 %v95, 64
  %v119 = vpop.permute.xlu0 %118
  %120 = vrot.lane.b32.xlu0 %v101, 64
  %v121 = vpop.permute.xlu0 %120
  %v124 = vmul.f32 %v115, %v119
  %v125 = vmul.f32 %v117, %v121
  %128 = vrot.lane.b32.xlu0 %v124, 64
  %v129 = vpop.permute.xlu0 %128
  %130 = vrot.lane.b32.xlu0 %v125, 64
  %v131 = vpop.permute.xlu0 %130
  %v134 = vadd.f32 %v24, %v129
  %v135 = vadd.f32 %v25, %v131
  %v136 = vtanh.pop %v134
  %v137 = vtanh.pop %v135
  %v138 = vsub.f32 1.0, %v115
  %v139 = vsub.f32 1.0, %v117
  %142 = vrot.lane.b32.xlu0 %v136, 96
  %v143 = vpop.permute.xlu0 %142
  %144 = vrot.lane.b32.xlu0 %v137, 96
  %v145 = vpop.permute.xlu0 %144
  %v148 = vmul.f32 %v138, %v143
  %v149 = vmul.f32 %v139, %v145
  %v150 = vmul.f32 %v115, 0.0
  %v151 = vmul.f32 %v117, 0.0
  %v152 = vadd.f32 %v148, %v150
  %v153 = vadd.f32 %v149, %v151
  %v155 = vlaneseq
  %v156 = vshrl.u32 %v155, 7
  %v157 = vsub.s32 0, %v156
  %v158 = vrot.slane %v37, %v157
  %v164 = vunpack.c.l.b16 %v32
  %v165 = vunpack.c.l.b16 %v33
  %v166 = vunpack.c.l.b16 %v34
  %v167 = vunpack.c.l.b16 %v35
  %v168 = vpack.c.b16 %v165, %v164
  %v169 = vpack.c.b16 %v167, %v166
  %172 = vmatprep.subr.bf16.mxu0 0
  %173 = vmatpush1.bf16.msra.mxu0 %v168
  %174 = vmatprep.subr.bf16.mxu0 0
  %175 = vmatpush1.bf16.msra.mxu0 %v169
  %176 = vmatprep.subr.bf16.mxu0 0
  %177 = vmatpush1.bf16.msra.mxu0 0
  %178 = vmatprep.subr.bf16.mxu0 0
  %179 = vmatpush1.bf16.msra.mxu0 0
  %180 = vmatprep.subr.bf16.mxu0 0
  %181 = vmatpush1.bf16.msra.mxu0 0
  %182 = vmatprep.subr.bf16.mxu0 0
  %183 = vmatpush1.bf16.msra.mxu0 0
  %184 = vmatprep.subr.bf16.mxu0 0
  %185 = vmatpush1.bf16.msra.mxu0 0
  %186 = vmatprep.subr.bf16.mxu0 0
  %187 = vmatpush1.bf16.msra.mxu0 0
  %188 = vmatprep.subr.bf16.mxu0 0
  %189 = vmatpush1.bf16.msra.mxu0 0
  %190 = vmatprep.subr.bf16.mxu0 0
  %191 = vmatpush1.bf16.msra.mxu0 0
  %192 = vmatprep.subr.bf16.mxu0 0
  %193 = vmatpush1.bf16.msra.mxu0 0
  %194 = vmatprep.subr.bf16.mxu0 0
  %195 = vmatpush1.bf16.msra.mxu0 0
  %196 = vmatprep.subr.bf16.mxu0 0
  %197 = vmatpush1.bf16.msra.mxu0 0
  %198 = vmatprep.subr.bf16.mxu0 0
  %199 = vmatpush1.bf16.msra.mxu0 0
  %200 = vmatprep.subr.bf16.mxu0 0
  %201 = vmatpush1.bf16.msra.mxu0 0
  %202 = vmatprep.subr.bf16.mxu0 0
  %203 = vmatpush1.bf16.msra.mxu0 0
  %204 = vmatprep.mubr.bf16.mxu0 0
  %205 = vmatmul.mubr.bf16.gmra.mrb[0].mxu0 %v58
  %v206 = vpop.f32.mrb[0].mxu0
  %v207 = vadd.f32 %v158, %v206
  %v208 = vpop.f32.mrb[0].mxu0
  %v209 = vpop.f32.mrb[0].mxu0
  %v210 = vpop.f32.mrb[0].mxu0
  %211 = vdwg.mxu0
  %v213 = vrot.slane %v207, 1
  %v214 = vrot.slane %v207, 2
  %v217 = vadd.f32 %v26, %v213
  %v218 = vadd.f32 %v27, %v214
  %v219 = vxor.u32 %v217, 2147483648
  %v220 = vxor.u32 %v218, 2147483648
  %v221 = vmul.f32 %v219, 1.442695
  %v222 = vpow.pop %v221
  %v223 = vmul.f32 %v220, 1.442695
  %v224 = vpow.pop %v223
  %v225 = vadd.f32 %v222, 1.0
  %v226 = vadd.f32 %v224, 1.0
  %v227 = vrcp.pop %v225
  %v228 = vmul.f32 1.0, %v227
  %v229 = vrcp.pop %v226
  %v230 = vmul.f32 1.0, %v229
  %231 = vrot.lane.b32.xlu0 %v213, 64
  %v232 = vpop.permute.xlu0 %231
  %233 = vrot.lane.b32.xlu0 %v214, 64
  %v234 = vpop.permute.xlu0 %233
  %v237 = vmul.f32 %v228, %v232
  %v238 = vmul.f32 %v230, %v234
  %241 = vrot.lane.b32.xlu0 %v237, 64
  %v242 = vpop.permute.xlu0 %241
  %243 = vrot.lane.b32.xlu0 %v238, 64
  %v244 = vpop.permute.xlu0 %243
  %v247 = vadd.f32 %v26, %v242
  %v248 = vadd.f32 %v27, %v244
  %v249 = vtanh.pop %v247
  %v250 = vtanh.pop %v248
  %v251 = vsub.f32 1.0, %v228
  %v252 = vsub.f32 1.0, %v230
  %255 = vrot.lane.b32.xlu0 %v249, 96
  %v256 = vpop.permute.xlu0 %255
  %257 = vrot.lane.b32.xlu0 %v250, 96
  %v258 = vpop.permute.xlu0 %257
  %v261 = vmul.f32 %v251, %v256
  %v262 = vmul.f32 %v252, %v258
  %v263 = vmul.f32 %v228, 0.0
  %v264 = vmul.f32 %v230, 0.0
  %v265 = vadd.f32 %v261, %v263
  %v266 = vadd.f32 %v262, %v264
  %269 = vrot.lane.b32.xlu0 %v152, 96
  %v270 = vpop.permute.xlu0 %269
  %271 = vrot.lane.b32.xlu0 %v153, 96
  %v272 = vpop.permute.xlu0 %271
  %vm275 = vcmask 253952
  %276 = vst.msk [vmem:[%s6] sm:$0x1] %vm275, %v270
  %277 = vst.msk [vmem:[%s6 + $0x8] sm:$0x1] %vm275, %v272
  %vm278 = vcmask 523527
  %279 = vst.msk [vmem:[%s6] sm:$0x80] %vm278, %v265
  %280 = vst.msk [vmem:[%s6 + $0x8] sm:$0x80] %vm278, %v266
  %v281 = vpack.c.bf16 %v152, %v152
  %v282 = vpack.c.bf16 %v153, %v153
  %v285 = vunpack.c.l.b16 %v281
  %v286 = vunpack.c.l.b16 %v282
  %v287 = vrot.slane %v286, 7
  %vm288 = vcmask 1041409
  %v289 = vsel %vm288, %v287, %v285
  %v290 = vpack.c.b16 %v289, %v289
  %291 = vrot.lane.b32.xlu0 %v290, 96
  %v292 = vpop.permute.xlu0 %291
  %v294 = vsel %vm56, %v292, 0
  %296 = vmatprep.subr.bf16.mxu0 0
  %297 = vmatpush1.bf16.msra.mxu0 %v52
  %298 = vmatprep.subr.bf16.mxu0 0
  %299 = vmatpush1.bf16.msra.mxu0 %v53
  %300 = vmatprep.subr.bf16.mxu0 0
  %301 = vmatpush1.bf16.msra.mxu0 0
  %302 = vmatprep.subr.bf16.mxu0 0
  %303 = vmatpush1.bf16.msra.mxu0 0
  %304 = vmatprep.subr.bf16.mxu0 0
  %305 = vmatpush1.bf16.msra.mxu0 0
  %306 = vmatprep.subr.bf16.mxu0 0
  %307 = vmatpush1.bf16.msra.mxu0 0
  %308 = vmatprep.subr.bf16.mxu0 0
  %309 = vmatpush1.bf16.msra.mxu0 0
  %310 = vmatprep.subr.bf16.mxu0 0
  %311 = vmatpush1.bf16.msra.mxu0 0
  %312 = vmatprep.subr.bf16.mxu0 0
  %313 = vmatpush1.bf16.msra.mxu0 0
  %314 = vmatprep.subr.bf16.mxu0 0
  %315 = vmatpush1.bf16.msra.mxu0 0
  %316 = vmatprep.subr.bf16.mxu0 0
  %317 = vmatpush1.bf16.msra.mxu0 0
  %318 = vmatprep.subr.bf16.mxu0 0
  %319 = vmatpush1.bf16.msra.mxu0 0
  %320 = vmatprep.subr.bf16.mxu0 0
  %321 = vmatpush1.bf16.msra.mxu0 0
  %322 = vmatprep.subr.bf16.mxu0 0
  %323 = vmatpush1.bf16.msra.mxu0 0
  %324 = vmatprep.subr.bf16.mxu0 0
  %325 = vmatpush1.bf16.msra.mxu0 0
  %326 = vmatprep.subr.bf16.mxu0 0
  %327 = vmatpush1.bf16.msra.mxu0 0
  %328 = vmatprep.mubr.bf16.mxu0 0
  %329 = vmatmul.mubr.bf16.gmra.mrb[0].mxu0 %v294
  %v330 = vpop.f32.mrb[0].mxu0
  %v331 = vadd.f32 %v42, %v330
  %v332 = vpop.f32.mrb[0].mxu0
  %v333 = vpop.f32.mrb[0].mxu0
  %v334 = vpop.f32.mrb[0].mxu0
  %335 = vdwg.mxu0
  %v337 = vrot.slane %v331, 7
  %v340 = vadd.f32 %v24, %v337
  %v341 = vadd.f32 %v25, %v331
  %v342 = vxor.u32 %v340, 2147483648
  %v343 = vxor.u32 %v341, 2147483648
  %v344 = vmul.f32 %v342, 1.442695
  %v345 = vpow.pop %v344
  %v346 = vmul.f32 %v343, 1.442695
  %v347 = vpow.pop %v346
  %v348 = vadd.f32 %v345, 1.0
  %v349 = vadd.f32 %v347, 1.0
  %v350 = vrcp.pop %v348
  %v351 = vmul.f32 1.0, %v350
  %v352 = vrcp.pop %v349
  %v353 = vmul.f32 1.0, %v352
  %354 = vrot.lane.b32.xlu0 %v337, 64
  %v355 = vpop.permute.xlu0 %354
  %356 = vrot.lane.b32.xlu0 %v331, 64
  %v357 = vpop.permute.xlu0 %356
  %v360 = vmul.f32 %v351, %v355
  %v361 = vmul.f32 %v353, %v357
  %364 = vrot.lane.b32.xlu0 %v360, 64
  %v365 = vpop.permute.xlu0 %364
  %366 = vrot.lane.b32.xlu0 %v361, 64
  %v367 = vpop.permute.xlu0 %366
  %v370 = vadd.f32 %v24, %v365
  %v371 = vadd.f32 %v25, %v367
  %v372 = vtanh.pop %v370
  %v373 = vtanh.pop %v371
  %v374 = vsub.f32 1.0, %v351
  %v375 = vsub.f32 1.0, %v353
  %378 = vrot.lane.b32.xlu0 %v372, 96
  %v379 = vpop.permute.xlu0 %378
  %380 = vrot.lane.b32.xlu0 %v373, 96
  %v381 = vpop.permute.xlu0 %380
  %v384 = vmul.f32 %v374, %v379
  %v385 = vmul.f32 %v375, %v381
  %v386 = vrot.slane %v152, 7
  %v387 = vrot.slane %v153, 7
  %v390 = vmul.f32 %v351, %v386
  %v391 = vmul.f32 %v353, %v387
  %v392 = vadd.f32 %v384, %v390
  %v393 = vadd.f32 %v385, %v391
  %v394 = vpack.c.bf16 %v265, %v265
  %v395 = vpack.c.bf16 %v266, %v266
  %v398 = vunpack.c.l.b16 %v394
  %v399 = vunpack.c.l.b16 %v395
  %v400 = vrot.slane %v398, 7
  %v401 = vrot.slane %v399, 6
  %v402 = vsel %vm288, %v401, %v400
  %v403 = vpack.c.b16 %v402, %v402
  %404 = vrot.lane.b32.xlu0 %v403, 96
  %v405 = vpop.permute.xlu0 %404
  %v407 = vsel %vm56, %v405, 0
  %409 = vmatprep.subr.bf16.mxu0 0
  %410 = vmatpush1.bf16.msra.mxu0 %v168
  %411 = vmatprep.subr.bf16.mxu0 0
  %412 = vmatpush1.bf16.msra.mxu0 %v169
  %413 = vmatprep.subr.bf16.mxu0 0
  %414 = vmatpush1.bf16.msra.mxu0 0
  %415 = vmatprep.subr.bf16.mxu0 0
  %416 = vmatpush1.bf16.msra.mxu0 0
  %417 = vmatprep.subr.bf16.mxu0 0
  %418 = vmatpush1.bf16.msra.mxu0 0
  %419 = vmatprep.subr.bf16.mxu0 0
  %420 = vmatpush1.bf16.msra.mxu0 0
  %421 = vmatprep.subr.bf16.mxu0 0
  %422 = vmatpush1.bf16.msra.mxu0 0
  %423 = vmatprep.subr.bf16.mxu0 0
  %424 = vmatpush1.bf16.msra.mxu0 0
  %425 = vmatprep.subr.bf16.mxu0 0
  %426 = vmatpush1.bf16.msra.mxu0 0
  %427 = vmatprep.subr.bf16.mxu0 0
  %428 = vmatpush1.bf16.msra.mxu0 0
  %429 = vmatprep.subr.bf16.mxu0 0
  %430 = vmatpush1.bf16.msra.mxu0 0
  %431 = vmatprep.subr.bf16.mxu0 0
  %432 = vmatpush1.bf16.msra.mxu0 0
  %433 = vmatprep.subr.bf16.mxu0 0
  %434 = vmatpush1.bf16.msra.mxu0 0
  %435 = vmatprep.subr.bf16.mxu0 0
  %436 = vmatpush1.bf16.msra.mxu0 0
  %437 = vmatprep.subr.bf16.mxu0 0
  %438 = vmatpush1.bf16.msra.mxu0 0
  %439 = vmatprep.subr.bf16.mxu0 0
  %440 = vmatpush1.bf16.msra.mxu0 0
  %441 = vmatprep.mubr.bf16.mxu0 0
  %442 = vmatmul.mubr.bf16.gmra.mrb[0].mxu0 %v407
  %v443 = vpop.f32.mrb[0].mxu0
  %v444 = vadd.f32 %v158, %v443
  %v445 = vpop.f32.mrb[0].mxu0
  %v446 = vpop.f32.mrb[0].mxu0
  %v447 = vpop.f32.mrb[0].mxu0
  %448 = vdwg.mxu0
  %v450 = vrot.slane %v444, 2
  %v451 = vrot.slane %v444, 3
  %v454 = vadd.f32 %v26, %v450
  %v455 = vadd.f32 %v27, %v451
  %v456 = vxor.u32 %v454, 2147483648
  %v457 = vxor.u32 %v455, 2147483648
  %v458 = vmul.f32 %v456, 1.442695
  %v459 = vpow.pop %v458
  %v460 = vmul.f32 %v457, 1.442695
  %v461 = vpow.pop %v460
  %v462 = vadd.f32 %v459, 1.0
  %v463 = vadd.f32 %v461, 1.0
  %v464 = vrcp.pop %v462
  %v465 = vmul.f32 1.0, %v464
  %v466 = vrcp.pop %v463
  %v467 = vmul.f32 1.0, %v466
  %468 = vrot.lane.b32.xlu0 %v450, 64
  %v469 = vpop.permute.xlu0 %468
  %470 = vrot.lane.b32.xlu0 %v451, 64
  %v471 = vpop.permute.xlu0 %470
  %v474 = vmul.f32 %v465, %v469
  %v475 = vmul.f32 %v467, %v471
  %478 = vrot.lane.b32.xlu0 %v474, 64
  %v479 = vpop.permute.xlu0 %478
  %480 = vrot.lane.b32.xlu0 %v475, 64
  %v481 = vpop.permute.xlu0 %480
  %v484 = vadd.f32 %v26, %v479
  %v485 = vadd.f32 %v27, %v481
  %v486 = vtanh.pop %v484
  %v487 = vtanh.pop %v485
  %v488 = vsub.f32 1.0, %v465
  %v489 = vsub.f32 1.0, %v467
  %492 = vrot.lane.b32.xlu0 %v486, 96
  %v493 = vpop.permute.xlu0 %492
  %494 = vrot.lane.b32.xlu0 %v487, 96
  %v495 = vpop.permute.xlu0 %494
  %v498 = vmul.f32 %v488, %v493
  %v499 = vmul.f32 %v489, %v495
  %v502 = vrot.slane %v265, 1
  %v503 = vrot.slane %v266, 1
  %v506 = vmul.f32 %v465, %v502
  %v507 = vmul.f32 %v467, %v503
  %v508 = vadd.f32 %v498, %v506
  %v509 = vadd.f32 %v499, %v507
  %512 = vrot.lane.b32.xlu0 %v392, 96
  %v513 = vpop.permute.xlu0 %512
  %514 = vrot.lane.b32.xlu0 %v393, 96
  %v515 = vpop.permute.xlu0 %514
  %vm518 = vcmask 254977
  %519 = vst.msk [vmem:[%s6] sm:$0x2] %vm518, %v513
  %520 = vst.msk [vmem:[%s6 + $0x8] sm:$0x2] %vm518, %v515
  %vm521 = vcmask 522502
  %522 = vst.msk [vmem:[%s6] sm:$0x40] %vm521, %v508
  %523 = vst.msk [vmem:[%s6 + $0x8] sm:$0x40] %vm521, %v509
  %v524 = vpack.c.bf16 %v392, %v392
  %v525 = vpack.c.bf16 %v393, %v393
  %v528 = vunpack.c.l.b16 %v524
  %v529 = vunpack.c.l.b16 %v525
  %v530 = vrot.slane %v528, 1
  %v531 = vsel %vm288, %v529, %v530
  %v532 = vpack.c.b16 %v531, %v531
  %533 = vrot.lane.b32.xlu0 %v532, 96
  %v534 = vpop.permute.xlu0 %533
  %v536 = vsel %vm56, %v534, 0
  %538 = vmatprep.subr.bf16.mxu0 0
  %539 = vmatpush1.bf16.msra.mxu0 %v52
  %540 = vmatprep.subr.bf16.mxu0 0
  %541 = vmatpush1.bf16.msra.mxu0 %v53
  %542 = vmatprep.subr.bf16.mxu0 0
  %543 = vmatpush1.bf16.msra.mxu0 0
  %544 = vmatprep.subr.bf16.mxu0 0
  %545 = vmatpush1.bf16.msra.mxu0 0
  %546 = vmatprep.subr.bf16.mxu0 0
  %547 = vmatpush1.bf16.msra.mxu0 0
  %548 = vmatprep.subr.bf16.mxu0 0
  %549 = vmatpush1.bf16.msra.mxu0 0
  %550 = vmatprep.subr.bf16.mxu0 0
  %551 = vmatpush1.bf16.msra.mxu0 0
  %552 = vmatprep.subr.bf16.mxu0 0
  %553 = vmatpush1.bf16.msra.mxu0 0
  %554 = vmatprep.subr.bf16.mxu0 0
  %555 = vmatpush1.bf16.msra.mxu0 0
  %556 = vmatprep.subr.bf16.mxu0 0
  %557 = vmatpush1.bf16.msra.mxu0 0
  %558 = vmatprep.subr.bf16.mxu0 0
  %559 = vmatpush1.bf16.msra.mxu0 0
  %560 = vmatprep.subr.bf16.mxu0 0
  %561 = vmatpush1.bf16.msra.mxu0 0
  %562 = vmatprep.subr.bf16.mxu0 0
  %563 = vmatpush1.bf16.msra.mxu0 0
  %564 = vmatprep.subr.bf16.mxu0 0
  %565 = vmatpush1.bf16.msra.mxu0 0
  %566 = vmatprep.subr.bf16.mxu0 0
  %567 = vmatpush1.bf16.msra.mxu0 0
  %568 = vmatprep.subr.bf16.mxu0 0
  %569 = vmatpush1.bf16.msra.mxu0 0
  %570 = vmatprep.mubr.bf16.mxu0 0
  %571 = vmatmul.mubr.bf16.gmra.mrb[0].mxu0 %v536
  %v572 = vpop.f32.mrb[0].mxu0
  %v573 = vadd.f32 %v42, %v572
  %v574 = vpop.f32.mrb[0].mxu0
  %v575 = vpop.f32.mrb[0].mxu0
  %v576 = vpop.f32.mrb[0].mxu0
  %577 = vdwg.mxu0
  %v579 = vrot.slane %v573, 6
  %v580 = vrot.slane %v573, 7
  %v583 = vadd.f32 %v24, %v579
  %v584 = vadd.f32 %v25, %v580
  %v585 = vxor.u32 %v583, 2147483648
  %v586 = vxor.u32 %v584, 2147483648
  %v587 = vmul.f32 %v585, 1.442695
  %v588 = vpow.pop %v587
  %v589 = vmul.f32 %v586, 1.442695
  %v590 = vpow.pop %v589
  %v591 = vadd.f32 %v588, 1.0
  %v592 = vadd.f32 %v590, 1.0
  %v593 = vrcp.pop %v591
  %v594 = vmul.f32 1.0, %v593
  %v595 = vrcp.pop %v592
  %v596 = vmul.f32 1.0, %v595
  %597 = vrot.lane.b32.xlu0 %v579, 64
  %v598 = vpop.permute.xlu0 %597
  %599 = vrot.lane.b32.xlu0 %v580, 64
  %v600 = vpop.permute.xlu0 %599
  %v603 = vmul.f32 %v594, %v598
  %v604 = vmul.f32 %v596, %v600
  %607 = vrot.lane.b32.xlu0 %v603, 64
  %v608 = vpop.permute.xlu0 %607
  %609 = vrot.lane.b32.xlu0 %v604, 64
  %v610 = vpop.permute.xlu0 %609
  %v613 = vadd.f32 %v24, %v608
  %v614 = vadd.f32 %v25, %v610
  %v615 = vtanh.pop %v613
  %v616 = vtanh.pop %v614
  %v617 = vsub.f32 1.0, %v594
  %v618 = vsub.f32 1.0, %v596
  %621 = vrot.lane.b32.xlu0 %v615, 96
  %v622 = vpop.permute.xlu0 %621
  %623 = vrot.lane.b32.xlu0 %v616, 96
  %v624 = vpop.permute.xlu0 %623
  %v627 = vmul.f32 %v617, %v622
  %v628 = vmul.f32 %v618, %v624
  %v629 = vrot.slane %v392, 7
  %v630 = vrot.slane %v393, 7
  %v633 = vmul.f32 %v594, %v629
  %v634 = vmul.f32 %v596, %v630
  %v635 = vadd.f32 %v627, %v633
  %v636 = vadd.f32 %v628, %v634
  %v637 = vpack.c.bf16 %v508, %v508
  %v638 = vpack.c.bf16 %v509, %v509
  %v641 = vunpack.c.l.b16 %v637
  %v642 = vunpack.c.l.b16 %v638
  %v643 = vrot.slane %v641, 6
  %v644 = vrot.slane %v642, 5
  %v645 = vsel %vm288, %v644, %v643
  %v646 = vpack.c.b16 %v645, %v645
  %647 = vrot.lane.b32.xlu0 %v646, 96
  %v648 = vpop.permute.xlu0 %647
  %v650 = vsel %vm56, %v648, 0
  %652 = vmatprep.subr.bf16.mxu0 0
  %653 = vmatpush1.bf16.msra.mxu0 %v168
  %654 = vmatprep.subr.bf16.mxu0 0
  %655 = vmatpush1.bf16.msra.mxu0 %v169
  %656 = vmatprep.subr.bf16.mxu0 0
  %657 = vmatpush1.bf16.msra.mxu0 0
  %658 = vmatprep.subr.bf16.mxu0 0
  %659 = vmatpush1.bf16.msra.mxu0 0
  %660 = vmatprep.subr.bf16.mxu0 0
  %661 = vmatpush1.bf16.msra.mxu0 0
  %662 = vmatprep.subr.bf16.mxu0 0
  %663 = vmatpush1.bf16.msra.mxu0 0
  %664 = vmatprep.subr.bf16.mxu0 0
  %665 = vmatpush1.bf16.msra.mxu0 0
  %666 = vmatprep.subr.bf16.mxu0 0
  %667 = vmatpush1.bf16.msra.mxu0 0
  %668 = vmatprep.subr.bf16.mxu0 0
  %669 = vmatpush1.bf16.msra.mxu0 0
  %670 = vmatprep.subr.bf16.mxu0 0
  %671 = vmatpush1.bf16.msra.mxu0 0
  %672 = vmatprep.subr.bf16.mxu0 0
  %673 = vmatpush1.bf16.msra.mxu0 0
  %674 = vmatprep.subr.bf16.mxu0 0
  %675 = vmatpush1.bf16.msra.mxu0 0
  %676 = vmatprep.subr.bf16.mxu0 0
  %677 = vmatpush1.bf16.msra.mxu0 0
  %678 = vmatprep.subr.bf16.mxu0 0
  %679 = vmatpush1.bf16.msra.mxu0 0
  %680 = vmatprep.subr.bf16.mxu0 0
  %681 = vmatpush1.bf16.msra.mxu0 0
  %682 = vmatprep.subr.bf16.mxu0 0
  %683 = vmatpush1.bf16.msra.mxu0 0
  %684 = vmatprep.mubr.bf16.mxu0 0
  %685 = vmatmul.mubr.bf16.gmra.mrb[0].mxu0 %v650
  %v686 = vpop.f32.mrb[0].mxu0
  %v687 = vadd.f32 %v158, %v686
  %v688 = vpop.f32.mrb[0].mxu0
  %v689 = vpop.f32.mrb[0].mxu0
  %v690 = vpop.f32.mrb[0].mxu0
  %691 = vdwg.mxu0
  %v693 = vrot.slane %v687, 3
  %v694 = vrot.slane %v687, 4
  %v697 = vadd.f32 %v26, %v693
  %v698 = vadd.f32 %v27, %v694
  %v699 = vxor.u32 %v697, 2147483648
  %v700 = vxor.u32 %v698, 2147483648
  %v701 = vmul.f32 %v699, 1.442695
  %v702 = vpow.pop %v701
  %v703 = vmul.f32 %v700, 1.442695
  %v704 = vpow.pop %v703
  %v705 = vadd.f32 %v702, 1.0
  %v706 = vadd.f32 %v704, 1.0
  %v707 = vrcp.pop %v705
  %v708 = vmul.f32 1.0, %v707
  %v709 = vrcp.pop %v706
  %v710 = vmul.f32 1.0, %v709
  %711 = vrot.lane.b32.xlu0 %v693, 64
  %v712 = vpop.permute.xlu0 %711
  %713 = vrot.lane.b32.xlu0 %v694, 64
  %v714 = vpop.permute.xlu0 %713
  %v717 = vmul.f32 %v708, %v712
  %v718 = vmul.f32 %v710, %v714
  %721 = vrot.lane.b32.xlu0 %v717, 64
  %v722 = vpop.permute.xlu0 %721
  %723 = vrot.lane.b32.xlu0 %v718, 64
  %v724 = vpop.permute.xlu0 %723
  %v727 = vadd.f32 %v26, %v722
  %v728 = vadd.f32 %v27, %v724
  %v729 = vtanh.pop %v727
  %v730 = vtanh.pop %v728
  %v731 = vsub.f32 1.0, %v708
  %v732 = vsub.f32 1.0, %v710
  %735 = vrot.lane.b32.xlu0 %v729, 96
  %v736 = vpop.permute.xlu0 %735
  %737 = vrot.lane.b32.xlu0 %v730, 96
  %v738 = vpop.permute.xlu0 %737
  %v741 = vmul.f32 %v731, %v736
  %v742 = vmul.f32 %v732, %v738
  %v745 = vrot.slane %v508, 1
  %v746 = vrot.slane %v509, 1
  %v749 = vmul.f32 %v708, %v745
  %v750 = vmul.f32 %v710, %v746
  %v751 = vadd.f32 %v741, %v749
  %v752 = vadd.f32 %v742, %v750
  %755 = vrot.lane.b32.xlu0 %v635, 96
  %v756 = vpop.permute.xlu0 %755
  %757 = vrot.lane.b32.xlu0 %v636, 96
  %v758 = vpop.permute.xlu0 %757
  %vm761 = vcmask 256002
  %762 = vst.msk [vmem:[%s6] sm:$0x4] %vm761, %v756
  %763 = vst.msk [vmem:[%s6 + $0x8] sm:$0x4] %vm761, %v758
  %vm764 = vcmask 521477
  %765 = vst.msk [vmem:[%s6] sm:$0x20] %vm764, %v751
  %766 = vst.msk [vmem:[%s6 + $0x8] sm:$0x20] %vm764, %v752
  %v767 = vpack.c.bf16 %v635, %v635
  %v768 = vpack.c.bf16 %v636, %v636
  %v771 = vunpack.c.l.b16 %v767
  %v772 = vunpack.c.l.b16 %v768
  %v773 = vrot.slane %v771, 2
  %v774 = vrot.slane %v772, 1
  %v775 = vsel %vm288, %v774, %v773
  %v776 = vpack.c.b16 %v775, %v775
  %777 = vrot.lane.b32.xlu0 %v776, 96
  %v778 = vpop.permute.xlu0 %777
  %v780 = vsel %vm56, %v778, 0
  %782 = vmatprep.subr.bf16.mxu0 0
  %783 = vmatpush1.bf16.msra.mxu0 %v52
  %784 = vmatprep.subr.bf16.mxu0 0
  %785 = vmatpush1.bf16.msra.mxu0 %v53
  %786 = vmatprep.subr.bf16.mxu0 0
  %787 = vmatpush1.bf16.msra.mxu0 0
  %788 = vmatprep.subr.bf16.mxu0 0
  %789 = vmatpush1.bf16.msra.mxu0 0
  %790 = vmatprep.subr.bf16.mxu0 0
  %791 = vmatpush1.bf16.msra.mxu0 0
  %792 = vmatprep.subr.bf16.mxu0 0
  %793 = vmatpush1.bf16.msra.mxu0 0
  %794 = vmatprep.subr.bf16.mxu0 0
  %795 = vmatpush1.bf16.msra.mxu0 0
  %796 = vmatprep.subr.bf16.mxu0 0
  %797 = vmatpush1.bf16.msra.mxu0 0
  %798 = vmatprep.subr.bf16.mxu0 0
  %799 = vmatpush1.bf16.msra.mxu0 0
  %800 = vmatprep.subr.bf16.mxu0 0
  %801 = vmatpush1.bf16.msra.mxu0 0
  %802 = vmatprep.subr.bf16.mxu0 0
  %803 = vmatpush1.bf16.msra.mxu0 0
  %804 = vmatprep.subr.bf16.mxu0 0
  %805 = vmatpush1.bf16.msra.mxu0 0
  %806 = vmatprep.subr.bf16.mxu0 0
  %807 = vmatpush1.bf16.msra.mxu0 0
  %808 = vmatprep.subr.bf16.mxu0 0
  %809 = vmatpush1.bf16.msra.mxu0 0
  %810 = vmatprep.subr.bf16.mxu0 0
  %811 = vmatpush1.bf16.msra.mxu0 0
  %812 = vmatprep.subr.bf16.mxu0 0
  %813 = vmatpush1.bf16.msra.mxu0 0
  %814 = vmatprep.mubr.bf16.mxu0 0
  %815 = vmatmul.mubr.bf16.gmra.mrb[0].mxu0 %v780
  %v816 = vpop.f32.mrb[0].mxu0
  %v817 = vadd.f32 %v42, %v816
  %v818 = vpop.f32.mrb[0].mxu0
  %v819 = vpop.f32.mrb[0].mxu0
  %v820 = vpop.f32.mrb[0].mxu0
  %821 = vdwg.mxu0
  %v823 = vrot.slane %v817, 5
  %v824 = vrot.slane %v817, 6
  %v827 = vadd.f32 %v24, %v823
  %v828 = vadd.f32 %v25, %v824
  %v829 = vxor.u32 %v827, 2147483648
  %v830 = vxor.u32 %v828, 2147483648
  %v831 = vmul.f32 %v829, 1.442695
  %v832 = vpow.pop %v831
  %v833 = vmul.f32 %v830, 1.442695
  %v834 = vpow.pop %v833
  %v835 = vadd.f32 %v832, 1.0
  %v836 = vadd.f32 %v834, 1.0
  %v837 = vrcp.pop %v835
  %v838 = vmul.f32 1.0, %v837
  %v839 = vrcp.pop %v836
  %v840 = vmul.f32 1.0, %v839
  %841 = vrot.lane.b32.xlu0 %v823, 64
  %v842 = vpop.permute.xlu0 %841
  %843 = vrot.lane.b32.xlu0 %v824, 64
  %v844 = vpop.permute.xlu0 %843
  %v847 = vmul.f32 %v838, %v842
  %v848 = vmul.f32 %v840, %v844
  %851 = vrot.lane.b32.xlu0 %v847, 64
  %v852 = vpop.permute.xlu0 %851
  %853 = vrot.lane.b32.xlu0 %v848, 64
  %v854 = vpop.permute.xlu0 %853
  %v857 = vadd.f32 %v24, %v852
  %v858 = vadd.f32 %v25, %v854
  %v859 = vtanh.pop %v857
  %v860 = vtanh.pop %v858
  %v861 = vsub.f32 1.0, %v838
  %v862 = vsub.f32 1.0, %v840
  %865 = vrot.lane.b32.xlu0 %v859, 96
  %v866 = vpop.permute.xlu0 %865
  %867 = vrot.lane.b32.xlu0 %v860, 96
  %v868 = vpop.permute.xlu0 %867
  %v871 = vmul.f32 %v861, %v866
  %v872 = vmul.f32 %v862, %v868
  %v873 = vrot.slane %v635, 7
  %v874 = vrot.slane %v636, 7
  %v877 = vmul.f32 %v838, %v873
  %v878 = vmul.f32 %v840, %v874
  %v879 = vadd.f32 %v871, %v877
  %v880 = vadd.f32 %v872, %v878
  %v881 = vpack.c.bf16 %v751, %v751
  %v882 = vpack.c.bf16 %v752, %v752
  %v885 = vunpack.c.l.b16 %v881
  %v886 = vunpack.c.l.b16 %v882
  %v887 = vrot.slane %v885, 5
  %v888 = vrot.slane %v886, 4
  %v889 = vsel %vm288, %v888, %v887
  %v890 = vpack.c.b16 %v889, %v889
  %891 = vrot.lane.b32.xlu0 %v890, 96
  %v892 = vpop.permute.xlu0 %891
  %v894 = vsel %vm56, %v892, 0
  %896 = vmatprep.subr.bf16.mxu0 0
  %897 = vmatpush1.bf16.msra.mxu0 %v168
  %898 = vmatprep.subr.bf16.mxu0 0
  %899 = vmatpush1.bf16.msra.mxu0 %v169
  %900 = vmatprep.subr.bf16.mxu0 0
  %901 = vmatpush1.bf16.msra.mxu0 0
  %902 = vmatprep.subr.bf16.mxu0 0
  %903 = vmatpush1.bf16.msra.mxu0 0
  %904 = vmatprep.subr.bf16.mxu0 0
  %905 = vmatpush1.bf16.msra.mxu0 0
  %906 = vmatprep.subr.bf16.mxu0 0
  %907 = vmatpush1.bf16.msra.mxu0 0
  %908 = vmatprep.subr.bf16.mxu0 0
  %909 = vmatpush1.bf16.msra.mxu0 0
  %910 = vmatprep.subr.bf16.mxu0 0
  %911 = vmatpush1.bf16.msra.mxu0 0
  %912 = vmatprep.subr.bf16.mxu0 0
  %913 = vmatpush1.bf16.msra.mxu0 0
  %914 = vmatprep.subr.bf16.mxu0 0
  %915 = vmatpush1.bf16.msra.mxu0 0
  %916 = vmatprep.subr.bf16.mxu0 0
  %917 = vmatpush1.bf16.msra.mxu0 0
  %918 = vmatprep.subr.bf16.mxu0 0
  %919 = vmatpush1.bf16.msra.mxu0 0
  %920 = vmatprep.subr.bf16.mxu0 0
  %921 = vmatpush1.bf16.msra.mxu0 0
  %922 = vmatprep.subr.bf16.mxu0 0
  %923 = vmatpush1.bf16.msra.mxu0 0
  %924 = vmatprep.subr.bf16.mxu0 0
  %925 = vmatpush1.bf16.msra.mxu0 0
  %926 = vmatprep.subr.bf16.mxu0 0
  %927 = vmatpush1.bf16.msra.mxu0 0
  %928 = vmatprep.mubr.bf16.mxu0 0
  %929 = vmatmul.mubr.bf16.gmra.mrb[0].mxu0 %v894
  %v930 = vpop.f32.mrb[0].mxu0
  %v931 = vadd.f32 %v158, %v930
  %v932 = vpop.f32.mrb[0].mxu0
  %v933 = vpop.f32.mrb[0].mxu0
  %v934 = vpop.f32.mrb[0].mxu0
  %935 = vdwg.mxu0
  %v937 = vrot.slane %v931, 4
  %v938 = vrot.slane %v931, 5
  %v941 = vadd.f32 %v26, %v937
  %v942 = vadd.f32 %v27, %v938
  %v943 = vxor.u32 %v941, 2147483648
  %v944 = vxor.u32 %v942, 2147483648
  %v945 = vmul.f32 %v943, 1.442695
  %v946 = vpow.pop %v945
  %v947 = vmul.f32 %v944, 1.442695
  %v948 = vpow.pop %v947
  %v949 = vadd.f32 %v946, 1.0
  %v950 = vadd.f32 %v948, 1.0
  %v951 = vrcp.pop %v949
  %v952 = vmul.f32 1.0, %v951
  %v953 = vrcp.pop %v950
  %v954 = vmul.f32 1.0, %v953
  %955 = vrot.lane.b32.xlu0 %v937, 64
  %v956 = vpop.permute.xlu0 %955
  %957 = vrot.lane.b32.xlu0 %v938, 64
  %v958 = vpop.permute.xlu0 %957
  %v961 = vmul.f32 %v952, %v956
  %v962 = vmul.f32 %v954, %v958
  %965 = vrot.lane.b32.xlu0 %v961, 64
  %v966 = vpop.permute.xlu0 %965
  %967 = vrot.lane.b32.xlu0 %v962, 64
  %v968 = vpop.permute.xlu0 %967
  %v971 = vadd.f32 %v26, %v966
  %v972 = vadd.f32 %v27, %v968
  %v973 = vtanh.pop %v971
  %v974 = vtanh.pop %v972
  %v975 = vsub.f32 1.0, %v952
  %v976 = vsub.f32 1.0, %v954
  %979 = vrot.lane.b32.xlu0 %v973, 96
  %v980 = vpop.permute.xlu0 %979
  %981 = vrot.lane.b32.xlu0 %v974, 96
  %v982 = vpop.permute.xlu0 %981
  %v985 = vmul.f32 %v975, %v980
  %v986 = vmul.f32 %v976, %v982
  %v989 = vrot.slane %v751, 1
  %v990 = vrot.slane %v752, 1
  %v993 = vmul.f32 %v952, %v989
  %v994 = vmul.f32 %v954, %v990
  %v995 = vadd.f32 %v985, %v993
  %v996 = vadd.f32 %v986, %v994
  %999 = vrot.lane.b32.xlu0 %v879, 96
  %v1000 = vpop.permute.xlu0 %999
  %1001 = vrot.lane.b32.xlu0 %v880, 96
  %v1002 = vpop.permute.xlu0 %1001
  %vm1005 = vcmask 257027
  %1006 = vst.msk [vmem:[%s6] sm:$0x8] %vm1005, %v1000
  %1007 = vst.msk [vmem:[%s6 + $0x8] sm:$0x8] %vm1005, %v1002
  %vm1008 = vcmask 520452
  %1009 = vst.msk [vmem:[%s6] sm:$0x10] %vm1008, %v995
  %1010 = vst.msk [vmem:[%s6 + $0x8] sm:$0x10] %vm1008, %v996
  %v1011 = vpack.c.bf16 %v879, %v879
  %v1012 = vpack.c.bf16 %v880, %v880
  %v1015 = vunpack.c.l.b16 %v1011
  %v1016 = vunpack.c.l.b16 %v1012
  %v1017 = vrot.slane %v1015, 3
  %v1018 = vrot.slane %v1016, 2
  %v1019 = vsel %vm288, %v1018, %v1017
  %v1020 = vpack.c.b16 %v1019, %v1019
  %1021 = vrot.lane.b32.xlu0 %v1020, 96
  %v1022 = vpop.permute.xlu0 %1021
  %v1024 = vsel %vm56, %v1022, 0
  %1026 = vmatprep.subr.bf16.mxu0 0
  %1027 = vmatpush1.bf16.msra.mxu0 %v52
  %1028 = vmatprep.subr.bf16.mxu0 0
  %1029 = vmatpush1.bf16.msra.mxu0 %v53
  %1030 = vmatprep.subr.bf16.mxu0 0
  %1031 = vmatpush1.bf16.msra.mxu0 0
  %1032 = vmatprep.subr.bf16.mxu0 0
  %1033 = vmatpush1.bf16.msra.mxu0 0
  %1034 = vmatprep.subr.bf16.mxu0 0
  %1035 = vmatpush1.bf16.msra.mxu0 0
  %1036 = vmatprep.subr.bf16.mxu0 0
  %1037 = vmatpush1.bf16.msra.mxu0 0
  %1038 = vmatprep.subr.bf16.mxu0 0
  %1039 = vmatpush1.bf16.msra.mxu0 0
  %1040 = vmatprep.subr.bf16.mxu0 0
  %1041 = vmatpush1.bf16.msra.mxu0 0
  %1042 = vmatprep.subr.bf16.mxu0 0
  %1043 = vmatpush1.bf16.msra.mxu0 0
  %1044 = vmatprep.subr.bf16.mxu0 0
  %1045 = vmatpush1.bf16.msra.mxu0 0
  %1046 = vmatprep.subr.bf16.mxu0 0
  %1047 = vmatpush1.bf16.msra.mxu0 0
  %1048 = vmatprep.subr.bf16.mxu0 0
  %1049 = vmatpush1.bf16.msra.mxu0 0
  %1050 = vmatprep.subr.bf16.mxu0 0
  %1051 = vmatpush1.bf16.msra.mxu0 0
  %1052 = vmatprep.subr.bf16.mxu0 0
  %1053 = vmatpush1.bf16.msra.mxu0 0
  %1054 = vmatprep.subr.bf16.mxu0 0
  %1055 = vmatpush1.bf16.msra.mxu0 0
  %1056 = vmatprep.subr.bf16.mxu0 0
  %1057 = vmatpush1.bf16.msra.mxu0 0
  %1058 = vmatprep.mubr.bf16.mxu0 0
  %1059 = vmatmul.mubr.bf16.gmra.mrb[0].mxu0 %v1024
  %v1060 = vpop.f32.mrb[0].mxu0
  %v1061 = vadd.f32 %v42, %v1060
  %v1062 = vpop.f32.mrb[0].mxu0
  %v1063 = vpop.f32.mrb[0].mxu0
  %v1064 = vpop.f32.mrb[0].mxu0
  %1065 = vdwg.mxu0
  %v1067 = vrot.slane %v1061, 4
  %v1068 = vrot.slane %v1061, 5
  %v1071 = vadd.f32 %v24, %v1067
  %v1072 = vadd.f32 %v25, %v1068
  %v1073 = vxor.u32 %v1071, 2147483648
  %v1074 = vxor.u32 %v1072, 2147483648
  %v1075 = vmul.f32 %v1073, 1.442695
  %v1076 = vpow.pop %v1075
  %v1077 = vmul.f32 %v1074, 1.442695
  %v1078 = vpow.pop %v1077
  %v1079 = vadd.f32 %v1076, 1.0
  %v1080 = vadd.f32 %v1078, 1.0
  %v1081 = vrcp.pop %v1079
  %v1082 = vmul.f32 1.0, %v1081
  %v1083 = vrcp.pop %v1080
  %v1084 = vmul.f32 1.0, %v1083
  %1085 = vrot.lane.b32.xlu0 %v1067, 64
  %v1086 = vpop.permute.xlu0 %1085
  %1087 = vrot.lane.b32.xlu0 %v1068, 64
  %v1088 = vpop.permute.xlu0 %1087
  %v1091 = vmul.f32 %v1082, %v1086
  %v1092 = vmul.f32 %v1084, %v1088
  %1095 = vrot.lane.b32.xlu0 %v1091, 64
  %v1096 = vpop.permute.xlu0 %1095
  %1097 = vrot.lane.b32.xlu0 %v1092, 64
  %v1098 = vpop.permute.xlu0 %1097
  %v1101 = vadd.f32 %v24, %v1096
  %v1102 = vadd.f32 %v25, %v1098
  %v1103 = vtanh.pop %v1101
  %v1104 = vtanh.pop %v1102
  %v1105 = vsub.f32 1.0, %v1082
  %v1106 = vsub.f32 1.0, %v1084
  %1109 = vrot.lane.b32.xlu0 %v1103, 96
  %v1110 = vpop.permute.xlu0 %1109
  %1111 = vrot.lane.b32.xlu0 %v1104, 96
  %v1112 = vpop.permute.xlu0 %1111
  %v1115 = vmul.f32 %v1105, %v1110
  %v1116 = vmul.f32 %v1106, %v1112
  %v1117 = vrot.slane %v879, 7
  %v1118 = vrot.slane %v880, 7
  %v1121 = vmul.f32 %v1082, %v1117
  %v1122 = vmul.f32 %v1084, %v1118
  %v1123 = vadd.f32 %v1115, %v1121
  %v1124 = vadd.f32 %v1116, %v1122
  %v1125 = vpack.c.bf16 %v995, %v995
  %v1126 = vpack.c.bf16 %v996, %v996
  %v1129 = vunpack.c.l.b16 %v1125
  %v1130 = vunpack.c.l.b16 %v1126
  %v1131 = vrot.slane %v1129, 4
  %v1132 = vrot.slane %v1130, 3
  %v1133 = vsel %vm288, %v1132, %v1131
  %v1134 = vpack.c.b16 %v1133, %v1133
  %1135 = vrot.lane.b32.xlu0 %v1134, 96
  %v1136 = vpop.permute.xlu0 %1135
  %v1138 = vsel %vm56, %v1136, 0
  %1140 = vmatprep.subr.bf16.mxu0 0
  %1141 = vmatpush1.bf16.msra.mxu0 %v168
  %1142 = vmatprep.subr.bf16.mxu0 0
  %1143 = vmatpush1.bf16.msra.mxu0 %v169
  %1144 = vmatprep.subr.bf16.mxu0 0
  %1145 = vmatpush1.bf16.msra.mxu0 0
  %1146 = vmatprep.subr.bf16.mxu0 0
  %1147 = vmatpush1.bf16.msra.mxu0 0
  %1148 = vmatprep.subr.bf16.mxu0 0
  %1149 = vmatpush1.bf16.msra.mxu0 0
  %1150 = vmatprep.subr.bf16.mxu0 0
  %1151 = vmatpush1.bf16.msra.mxu0 0
  %1152 = vmatprep.subr.bf16.mxu0 0
  %1153 = vmatpush1.bf16.msra.mxu0 0
  %1154 = vmatprep.subr.bf16.mxu0 0
  %1155 = vmatpush1.bf16.msra.mxu0 0
  %1156 = vmatprep.subr.bf16.mxu0 0
  %1157 = vmatpush1.bf16.msra.mxu0 0
  %1158 = vmatprep.subr.bf16.mxu0 0
  %1159 = vmatpush1.bf16.msra.mxu0 0
  %1160 = vmatprep.subr.bf16.mxu0 0
  %1161 = vmatpush1.bf16.msra.mxu0 0
  %1162 = vmatprep.subr.bf16.mxu0 0
  %1163 = vmatpush1.bf16.msra.mxu0 0
  %1164 = vmatprep.subr.bf16.mxu0 0
  %1165 = vmatpush1.bf16.msra.mxu0 0
  %1166 = vmatprep.subr.bf16.mxu0 0
  %1167 = vmatpush1.bf16.msra.mxu0 0
  %1168 = vmatprep.subr.bf16.mxu0 0
  %1169 = vmatpush1.bf16.msra.mxu0 0
  %1170 = vmatprep.subr.bf16.mxu0 0
  %1171 = vmatpush1.bf16.msra.mxu0 0
  %1172 = vmatprep.mubr.bf16.mxu0 0
  %1173 = vmatmul.mubr.bf16.gmra.mrb[0].mxu0 %v1138
  %v1174 = vpop.f32.mrb[0].mxu0
  %v1175 = vadd.f32 %v158, %v1174
  %v1176 = vpop.f32.mrb[0].mxu0
  %v1177 = vpop.f32.mrb[0].mxu0
  %v1178 = vpop.f32.mrb[0].mxu0
  %1179 = vdwg.mxu0
  %v1181 = vrot.slane %v1175, 5
  %v1182 = vrot.slane %v1175, 6
  %v1185 = vadd.f32 %v26, %v1181
  %v1186 = vadd.f32 %v27, %v1182
  %v1187 = vxor.u32 %v1185, 2147483648
  %v1188 = vxor.u32 %v1186, 2147483648
  %v1189 = vmul.f32 %v1187, 1.442695
  %v1190 = vpow.pop %v1189
  %v1191 = vmul.f32 %v1188, 1.442695
  %v1192 = vpow.pop %v1191
  %v1193 = vadd.f32 %v1190, 1.0
  %v1194 = vadd.f32 %v1192, 1.0
  %v1195 = vrcp.pop %v1193
  %v1196 = vmul.f32 1.0, %v1195
  %v1197 = vrcp.pop %v1194
  %v1198 = vmul.f32 1.0, %v1197
  %1199 = vrot.lane.b32.xlu0 %v1181, 64
  %v1200 = vpop.permute.xlu0 %1199
  %1201 = vrot.lane.b32.xlu0 %v1182, 64
  %v1202 = vpop.permute.xlu0 %1201
  %v1205 = vmul.f32 %v1196, %v1200
  %v1206 = vmul.f32 %v1198, %v1202
  %1209 = vrot.lane.b32.xlu0 %v1205, 64
  %v1210 = vpop.permute.xlu0 %1209
  %1211 = vrot.lane.b32.xlu0 %v1206, 64
  %v1212 = vpop.permute.xlu0 %1211
  %v1215 = vadd.f32 %v26, %v1210
  %v1216 = vadd.f32 %v27, %v1212
  %v1217 = vtanh.pop %v1215
  %v1218 = vtanh.pop %v1216
  %v1219 = vsub.f32 1.0, %v1196
  %v1220 = vsub.f32 1.0, %v1198
  %1223 = vrot.lane.b32.xlu0 %v1217, 96
  %v1224 = vpop.permute.xlu0 %1223
  %1225 = vrot.lane.b32.xlu0 %v1218, 96
  %v1226 = vpop.permute.xlu0 %1225
  %v1229 = vmul.f32 %v1219, %v1224
  %v1230 = vmul.f32 %v1220, %v1226
  %v1233 = vrot.slane %v995, 1
  %v1234 = vrot.slane %v996, 1
  %v1237 = vmul.f32 %v1196, %v1233
  %v1238 = vmul.f32 %v1198, %v1234
  %v1239 = vadd.f32 %v1229, %v1237
  %v1240 = vadd.f32 %v1230, %v1238
  %1243 = vrot.lane.b32.xlu0 %v1123, 96
  %v1244 = vpop.permute.xlu0 %1243
  %1245 = vrot.lane.b32.xlu0 %v1124, 96
  %v1246 = vpop.permute.xlu0 %1245
  %vm1249 = vcmask 258052
  %1250 = vst.msk [vmem:[%s6] sm:$0x10] %vm1249, %v1244
  %1251 = vst.msk [vmem:[%s6 + $0x8] sm:$0x10] %vm1249, %v1246
  %vm1252 = vcmask 519427
  %1253 = vst.msk [vmem:[%s6] sm:$0x8] %vm1252, %v1239
  %1254 = vst.msk [vmem:[%s6 + $0x8] sm:$0x8] %vm1252, %v1240
  %v1255 = vpack.c.bf16 %v1123, %v1123
  %v1256 = vpack.c.bf16 %v1124, %v1124
  %v1259 = vunpack.c.l.b16 %v1255
  %v1260 = vunpack.c.l.b16 %v1256
  %v1261 = vrot.slane %v1259, 4
  %v1262 = vrot.slane %v1260, 3
  %v1263 = vsel %vm288, %v1262, %v1261
  %v1264 = vpack.c.b16 %v1263, %v1263
  %1265 = vrot.lane.b32.xlu0 %v1264, 96
  %v1266 = vpop.permute.xlu0 %1265
  %v1268 = vsel %vm56, %v1266, 0
  %1270 = vmatprep.subr.bf16.mxu0 0
  %1271 = vmatpush1.bf16.msra.mxu0 %v52
  %1272 = vmatprep.subr.bf16.mxu0 0
  %1273 = vmatpush1.bf16.msra.mxu0 %v53
  %1274 = vmatprep.subr.bf16.mxu0 0
  %1275 = vmatpush1.bf16.msra.mxu0 0
  %1276 = vmatprep.subr.bf16.mxu0 0
  %1277 = vmatpush1.bf16.msra.mxu0 0
  %1278 = vmatprep.subr.bf16.mxu0 0
  %1279 = vmatpush1.bf16.msra.mxu0 0
  %1280 = vmatprep.subr.bf16.mxu0 0
  %1281 = vmatpush1.bf16.msra.mxu0 0
  %1282 = vmatprep.subr.bf16.mxu0 0
  %1283 = vmatpush1.bf16.msra.mxu0 0
  %1284 = vmatprep.subr.bf16.mxu0 0
  %1285 = vmatpush1.bf16.msra.mxu0 0
  %1286 = vmatprep.subr.bf16.mxu0 0
  %1287 = vmatpush1.bf16.msra.mxu0 0
  %1288 = vmatprep.subr.bf16.mxu0 0
  %1289 = vmatpush1.bf16.msra.mxu0 0
  %1290 = vmatprep.subr.bf16.mxu0 0
  %1291 = vmatpush1.bf16.msra.mxu0 0
  %1292 = vmatprep.subr.bf16.mxu0 0
  %1293 = vmatpush1.bf16.msra.mxu0 0
  %1294 = vmatprep.subr.bf16.mxu0 0
  %1295 = vmatpush1.bf16.msra.mxu0 0
  %1296 = vmatprep.subr.bf16.mxu0 0
  %1297 = vmatpush1.bf16.msra.mxu0 0
  %1298 = vmatprep.subr.bf16.mxu0 0
  %1299 = vmatpush1.bf16.msra.mxu0 0
  %1300 = vmatprep.subr.bf16.mxu0 0
  %1301 = vmatpush1.bf16.msra.mxu0 0
  %1302 = vmatprep.mubr.bf16.mxu0 0
  %1303 = vmatmul.mubr.bf16.gmra.mrb[0].mxu0 %v1268
  %v1304 = vpop.f32.mrb[0].mxu0
  %v1305 = vadd.f32 %v42, %v1304
  %v1306 = vpop.f32.mrb[0].mxu0
  %v1307 = vpop.f32.mrb[0].mxu0
  %v1308 = vpop.f32.mrb[0].mxu0
  %1309 = vdwg.mxu0
  %v1311 = vrot.slane %v1305, 3
  %v1312 = vrot.slane %v1305, 4
  %v1315 = vadd.f32 %v24, %v1311
  %v1316 = vadd.f32 %v25, %v1312
  %v1317 = vxor.u32 %v1315, 2147483648
  %v1318 = vxor.u32 %v1316, 2147483648
  %v1319 = vmul.f32 %v1317, 1.442695
  %v1320 = vpow.pop %v1319
  %v1321 = vmul.f32 %v1318, 1.442695
  %v1322 = vpow.pop %v1321
  %v1323 = vadd.f32 %v1320, 1.0
  %v1324 = vadd.f32 %v1322, 1.0
  %v1325 = vrcp.pop %v1323
  %v1326 = vmul.f32 1.0, %v1325
  %v1327 = vrcp.pop %v1324
  %v1328 = vmul.f32 1.0, %v1327
  %1329 = vrot.lane.b32.xlu0 %v1311, 64
  %v1330 = vpop.permute.xlu0 %1329
  %1331 = vrot.lane.b32.xlu0 %v1312, 64
  %v1332 = vpop.permute.xlu0 %1331
  %v1335 = vmul.f32 %v1326, %v1330
  %v1336 = vmul.f32 %v1328, %v1332
  %1339 = vrot.lane.b32.xlu0 %v1335, 64
  %v1340 = vpop.permute.xlu0 %1339
  %1341 = vrot.lane.b32.xlu0 %v1336, 64
  %v1342 = vpop.permute.xlu0 %1341
  %v1345 = vadd.f32 %v24, %v1340
  %v1346 = vadd.f32 %v25, %v1342
  %v1347 = vtanh.pop %v1345
  %v1348 = vtanh.pop %v1346
  %v1349 = vsub.f32 1.0, %v1326
  %v1350 = vsub.f32 1.0, %v1328
  %1353 = vrot.lane.b32.xlu0 %v1347, 96
  %v1354 = vpop.permute.xlu0 %1353
  %1355 = vrot.lane.b32.xlu0 %v1348, 96
  %v1356 = vpop.permute.xlu0 %1355
  %v1359 = vmul.f32 %v1349, %v1354
  %v1360 = vmul.f32 %v1350, %v1356
  %v1361 = vrot.slane %v1123, 7
  %v1362 = vrot.slane %v1124, 7
  %v1365 = vmul.f32 %v1326, %v1361
  %v1366 = vmul.f32 %v1328, %v1362
  %v1367 = vadd.f32 %v1359, %v1365
  %v1368 = vadd.f32 %v1360, %v1366
  %v1369 = vpack.c.bf16 %v1239, %v1239
  %v1370 = vpack.c.bf16 %v1240, %v1240
  %v1373 = vunpack.c.l.b16 %v1369
  %v1374 = vunpack.c.l.b16 %v1370
  %v1375 = vrot.slane %v1373, 3
  %v1376 = vrot.slane %v1374, 2
  %v1377 = vsel %vm288, %v1376, %v1375
  %v1378 = vpack.c.b16 %v1377, %v1377
  %1379 = vrot.lane.b32.xlu0 %v1378, 96
  %v1380 = vpop.permute.xlu0 %1379
  %v1382 = vsel %vm56, %v1380, 0
  %1384 = vmatprep.subr.bf16.mxu0 0
  %1385 = vmatpush1.bf16.msra.mxu0 %v168
  %1386 = vmatprep.subr.bf16.mxu0 0
  %1387 = vmatpush1.bf16.msra.mxu0 %v169
  %1388 = vmatprep.subr.bf16.mxu0 0
  %1389 = vmatpush1.bf16.msra.mxu0 0
  %1390 = vmatprep.subr.bf16.mxu0 0
  %1391 = vmatpush1.bf16.msra.mxu0 0
  %1392 = vmatprep.subr.bf16.mxu0 0
  %1393 = vmatpush1.bf16.msra.mxu0 0
  %1394 = vmatprep.subr.bf16.mxu0 0
  %1395 = vmatpush1.bf16.msra.mxu0 0
  %1396 = vmatprep.subr.bf16.mxu0 0
  %1397 = vmatpush1.bf16.msra.mxu0 0
  %1398 = vmatprep.subr.bf16.mxu0 0
  %1399 = vmatpush1.bf16.msra.mxu0 0
  %1400 = vmatprep.subr.bf16.mxu0 0
  %1401 = vmatpush1.bf16.msra.mxu0 0
  %1402 = vmatprep.subr.bf16.mxu0 0
  %1403 = vmatpush1.bf16.msra.mxu0 0
  %1404 = vmatprep.subr.bf16.mxu0 0
  %1405 = vmatpush1.bf16.msra.mxu0 0
  %1406 = vmatprep.subr.bf16.mxu0 0
  %1407 = vmatpush1.bf16.msra.mxu0 0
  %1408 = vmatprep.subr.bf16.mxu0 0
  %1409 = vmatpush1.bf16.msra.mxu0 0
  %1410 = vmatprep.subr.bf16.mxu0 0
  %1411 = vmatpush1.bf16.msra.mxu0 0
  %1412 = vmatprep.subr.bf16.mxu0 0
  %1413 = vmatpush1.bf16.msra.mxu0 0
  %1414 = vmatprep.subr.bf16.mxu0 0
  %1415 = vmatpush1.bf16.msra.mxu0 0
  %1416 = vmatprep.mubr.bf16.mxu0 0
  %1417 = vmatmul.mubr.bf16.gmra.mrb[0].mxu0 %v1382
  %v1418 = vpop.f32.mrb[0].mxu0
  %v1419 = vadd.f32 %v158, %v1418
  %v1420 = vpop.f32.mrb[0].mxu0
  %v1421 = vpop.f32.mrb[0].mxu0
  %v1422 = vpop.f32.mrb[0].mxu0
  %1423 = vdwg.mxu0
  %v1425 = vrot.slane %v1419, 6
  %v1426 = vrot.slane %v1419, 7
  %v1429 = vadd.f32 %v26, %v1425
  %v1430 = vadd.f32 %v27, %v1426
  %v1431 = vxor.u32 %v1429, 2147483648
  %v1432 = vxor.u32 %v1430, 2147483648
  %v1433 = vmul.f32 %v1431, 1.442695
  %v1434 = vpow.pop %v1433
  %v1435 = vmul.f32 %v1432, 1.442695
  %v1436 = vpow.pop %v1435
  %v1437 = vadd.f32 %v1434, 1.0
  %v1438 = vadd.f32 %v1436, 1.0
  %v1439 = vrcp.pop %v1437
  %v1440 = vmul.f32 1.0, %v1439
  %v1441 = vrcp.pop %v1438
  %v1442 = vmul.f32 1.0, %v1441
  %1443 = vrot.lane.b32.xlu0 %v1425, 64
  %v1444 = vpop.permute.xlu0 %1443
  %1445 = vrot.lane.b32.xlu0 %v1426, 64
  %v1446 = vpop.permute.xlu0 %1445
  %v1449 = vmul.f32 %v1440, %v1444
  %v1450 = vmul.f32 %v1442, %v1446
  %1453 = vrot.lane.b32.xlu0 %v1449, 64
  %v1454 = vpop.permute.xlu0 %1453
  %1455 = vrot.lane.b32.xlu0 %v1450, 64
  %v1456 = vpop.permute.xlu0 %1455
  %v1459 = vadd.f32 %v26, %v1454
  %v1460 = vadd.f32 %v27, %v1456
  %v1461 = vtanh.pop %v1459
  %v1462 = vtanh.pop %v1460
  %v1463 = vsub.f32 1.0, %v1440
  %v1464 = vsub.f32 1.0, %v1442
  %1467 = vrot.lane.b32.xlu0 %v1461, 96
  %v1468 = vpop.permute.xlu0 %1467
  %1469 = vrot.lane.b32.xlu0 %v1462, 96
  %v1470 = vpop.permute.xlu0 %1469
  %v1473 = vmul.f32 %v1463, %v1468
  %v1474 = vmul.f32 %v1464, %v1470
  %v1477 = vrot.slane %v1239, 1
  %v1478 = vrot.slane %v1240, 1
  %v1481 = vmul.f32 %v1440, %v1477
  %v1482 = vmul.f32 %v1442, %v1478
  %v1483 = vadd.f32 %v1473, %v1481
  %v1484 = vadd.f32 %v1474, %v1482
  %1487 = vrot.lane.b32.xlu0 %v1367, 96
  %v1488 = vpop.permute.xlu0 %1487
  %1489 = vrot.lane.b32.xlu0 %v1368, 96
  %v1490 = vpop.permute.xlu0 %1489
  %vm1493 = vcmask 259077
  %1494 = vst.msk [vmem:[%s6] sm:$0x20] %vm1493, %v1488
  %1495 = vst.msk [vmem:[%s6 + $0x8] sm:$0x20] %vm1493, %v1490
  %vm1496 = vcmask 518402
  %1497 = vst.msk [vmem:[%s6] sm:$0x4] %vm1496, %v1483
  %1498 = vst.msk [vmem:[%s6 + $0x8] sm:$0x4] %vm1496, %v1484
  %v1499 = vpack.c.bf16 %v1367, %v1367
  %v1500 = vpack.c.bf16 %v1368, %v1368
  %v1503 = vunpack.c.l.b16 %v1499
  %v1504 = vunpack.c.l.b16 %v1500
  %v1505 = vrot.slane %v1503, 5
  %v1506 = vrot.slane %v1504, 4
  %v1507 = vsel %vm288, %v1506, %v1505
  %v1508 = vpack.c.b16 %v1507, %v1507
  %1509 = vrot.lane.b32.xlu0 %v1508, 96
  %v1510 = vpop.permute.xlu0 %1509
  %v1512 = vsel %vm56, %v1510, 0
  %1514 = vmatprep.subr.bf16.mxu0 0
  %1515 = vmatpush1.bf16.msra.mxu0 %v52
  %1516 = vmatprep.subr.bf16.mxu0 0
  %1517 = vmatpush1.bf16.msra.mxu0 %v53
  %1518 = vmatprep.subr.bf16.mxu0 0
  %1519 = vmatpush1.bf16.msra.mxu0 0
  %1520 = vmatprep.subr.bf16.mxu0 0
  %1521 = vmatpush1.bf16.msra.mxu0 0
  %1522 = vmatprep.subr.bf16.mxu0 0
  %1523 = vmatpush1.bf16.msra.mxu0 0
  %1524 = vmatprep.subr.bf16.mxu0 0
  %1525 = vmatpush1.bf16.msra.mxu0 0
  %1526 = vmatprep.subr.bf16.mxu0 0
  %1527 = vmatpush1.bf16.msra.mxu0 0
  %1528 = vmatprep.subr.bf16.mxu0 0
  %1529 = vmatpush1.bf16.msra.mxu0 0
  %1530 = vmatprep.subr.bf16.mxu0 0
  %1531 = vmatpush1.bf16.msra.mxu0 0
  %1532 = vmatprep.subr.bf16.mxu0 0
  %1533 = vmatpush1.bf16.msra.mxu0 0
  %1534 = vmatprep.subr.bf16.mxu0 0
  %1535 = vmatpush1.bf16.msra.mxu0 0
  %1536 = vmatprep.subr.bf16.mxu0 0
  %1537 = vmatpush1.bf16.msra.mxu0 0
  %1538 = vmatprep.subr.bf16.mxu0 0
  %1539 = vmatpush1.bf16.msra.mxu0 0
  %1540 = vmatprep.subr.bf16.mxu0 0
  %1541 = vmatpush1.bf16.msra.mxu0 0
  %1542 = vmatprep.subr.bf16.mxu0 0
  %1543 = vmatpush1.bf16.msra.mxu0 0
  %1544 = vmatprep.subr.bf16.mxu0 0
  %1545 = vmatpush1.bf16.msra.mxu0 0
  %1546 = vmatprep.mubr.bf16.mxu0 0
  %1547 = vmatmul.mubr.bf16.gmra.mrb[0].mxu0 %v1512
  %v1548 = vpop.f32.mrb[0].mxu0
  %v1549 = vadd.f32 %v42, %v1548
  %v1550 = vpop.f32.mrb[0].mxu0
  %v1551 = vpop.f32.mrb[0].mxu0
  %v1552 = vpop.f32.mrb[0].mxu0
  %1553 = vdwg.mxu0
  %v1555 = vrot.slane %v1549, 2
  %v1556 = vrot.slane %v1549, 3
  %v1559 = vadd.f32 %v24, %v1555
  %v1560 = vadd.f32 %v25, %v1556
  %v1561 = vxor.u32 %v1559, 2147483648
  %v1562 = vxor.u32 %v1560, 2147483648
  %v1563 = vmul.f32 %v1561, 1.442695
  %v1564 = vpow.pop %v1563
  %v1565 = vmul.f32 %v1562, 1.442695
  %v1566 = vpow.pop %v1565
  %v1567 = vadd.f32 %v1564, 1.0
  %v1568 = vadd.f32 %v1566, 1.0
  %v1569 = vrcp.pop %v1567
  %v1570 = vmul.f32 1.0, %v1569
  %v1571 = vrcp.pop %v1568
  %v1572 = vmul.f32 1.0, %v1571
  %1573 = vrot.lane.b32.xlu0 %v1555, 64
  %v1574 = vpop.permute.xlu0 %1573
  %1575 = vrot.lane.b32.xlu0 %v1556, 64
  %v1576 = vpop.permute.xlu0 %1575
  %v1579 = vmul.f32 %v1570, %v1574
  %v1580 = vmul.f32 %v1572, %v1576
  %1583 = vrot.lane.b32.xlu0 %v1579, 64
  %v1584 = vpop.permute.xlu0 %1583
  %1585 = vrot.lane.b32.xlu0 %v1580, 64
  %v1586 = vpop.permute.xlu0 %1585
  %v1589 = vadd.f32 %v24, %v1584
  %v1590 = vadd.f32 %v25, %v1586
  %v1591 = vtanh.pop %v1589
  %v1592 = vtanh.pop %v1590
  %v1593 = vsub.f32 1.0, %v1570
  %v1594 = vsub.f32 1.0, %v1572
  %1597 = vrot.lane.b32.xlu0 %v1591, 96
  %v1598 = vpop.permute.xlu0 %1597
  %1599 = vrot.lane.b32.xlu0 %v1592, 96
  %v1600 = vpop.permute.xlu0 %1599
  %v1603 = vmul.f32 %v1593, %v1598
  %v1604 = vmul.f32 %v1594, %v1600
  %v1605 = vrot.slane %v1367, 7
  %v1606 = vrot.slane %v1368, 7
  %v1609 = vmul.f32 %v1570, %v1605
  %v1610 = vmul.f32 %v1572, %v1606
  %v1611 = vadd.f32 %v1603, %v1609
  %v1612 = vadd.f32 %v1604, %v1610
  %v1613 = vpack.c.bf16 %v1483, %v1483
  %v1614 = vpack.c.bf16 %v1484, %v1484
  %v1617 = vunpack.c.l.b16 %v1613
  %v1618 = vunpack.c.l.b16 %v1614
  %v1619 = vrot.slane %v1617, 2
  %v1620 = vrot.slane %v1618, 1
  %v1621 = vsel %vm288, %v1620, %v1619
  %v1622 = vpack.c.b16 %v1621, %v1621
  %1623 = vrot.lane.b32.xlu0 %v1622, 96
  %v1624 = vpop.permute.xlu0 %1623
  %v1626 = vsel %vm56, %v1624, 0
  %1628 = vmatprep.subr.bf16.mxu0 0
  %1629 = vmatpush1.bf16.msra.mxu0 %v168
  %1630 = vmatprep.subr.bf16.mxu0 0
  %1631 = vmatpush1.bf16.msra.mxu0 %v169
  %1632 = vmatprep.subr.bf16.mxu0 0
  %1633 = vmatpush1.bf16.msra.mxu0 0
  %1634 = vmatprep.subr.bf16.mxu0 0
  %1635 = vmatpush1.bf16.msra.mxu0 0
  %1636 = vmatprep.subr.bf16.mxu0 0
  %1637 = vmatpush1.bf16.msra.mxu0 0
  %1638 = vmatprep.subr.bf16.mxu0 0
  %1639 = vmatpush1.bf16.msra.mxu0 0
  %1640 = vmatprep.subr.bf16.mxu0 0
  %1641 = vmatpush1.bf16.msra.mxu0 0
  %1642 = vmatprep.subr.bf16.mxu0 0
  %1643 = vmatpush1.bf16.msra.mxu0 0
  %1644 = vmatprep.subr.bf16.mxu0 0
  %1645 = vmatpush1.bf16.msra.mxu0 0
  %1646 = vmatprep.subr.bf16.mxu0 0
  %1647 = vmatpush1.bf16.msra.mxu0 0
  %1648 = vmatprep.subr.bf16.mxu0 0
  %1649 = vmatpush1.bf16.msra.mxu0 0
  %1650 = vmatprep.subr.bf16.mxu0 0
  %1651 = vmatpush1.bf16.msra.mxu0 0
  %1652 = vmatprep.subr.bf16.mxu0 0
  %1653 = vmatpush1.bf16.msra.mxu0 0
  %1654 = vmatprep.subr.bf16.mxu0 0
  %1655 = vmatpush1.bf16.msra.mxu0 0
  %1656 = vmatprep.subr.bf16.mxu0 0
  %1657 = vmatpush1.bf16.msra.mxu0 0
  %1658 = vmatprep.subr.bf16.mxu0 0
  %1659 = vmatpush1.bf16.msra.mxu0 0
  %1660 = vmatprep.mubr.bf16.mxu0 0
  %1661 = vmatmul.mubr.bf16.gmra.mrb[0].mxu0 %v1626
  %v1662 = vpop.f32.mrb[0].mxu0
  %v1663 = vadd.f32 %v158, %v1662
  %v1664 = vpop.f32.mrb[0].mxu0
  %v1665 = vpop.f32.mrb[0].mxu0
  %v1666 = vpop.f32.mrb[0].mxu0
  %1667 = vdwg.mxu0
  %v1669 = vrot.slane %v1663, 7
  %v1672 = vadd.f32 %v26, %v1669
  %v1673 = vadd.f32 %v27, %v1663
  %v1674 = vxor.u32 %v1672, 2147483648
  %v1675 = vxor.u32 %v1673, 2147483648
  %v1676 = vmul.f32 %v1674, 1.442695
  %v1677 = vpow.pop %v1676
  %v1678 = vmul.f32 %v1675, 1.442695
  %v1679 = vpow.pop %v1678
  %v1680 = vadd.f32 %v1677, 1.0
  %v1681 = vadd.f32 %v1679, 1.0
  %v1682 = vrcp.pop %v1680
  %v1683 = vmul.f32 1.0, %v1682
  %v1684 = vrcp.pop %v1681
  %v1685 = vmul.f32 1.0, %v1684
  %1686 = vrot.lane.b32.xlu0 %v1669, 64
  %v1687 = vpop.permute.xlu0 %1686
  %1688 = vrot.lane.b32.xlu0 %v1663, 64
  %v1689 = vpop.permute.xlu0 %1688
  %v1692 = vmul.f32 %v1683, %v1687
  %v1693 = vmul.f32 %v1685, %v1689
  %1696 = vrot.lane.b32.xlu0 %v1692, 64
  %v1697 = vpop.permute.xlu0 %1696
  %1698 = vrot.lane.b32.xlu0 %v1693, 64
  %v1699 = vpop.permute.xlu0 %1698
  %v1702 = vadd.f32 %v26, %v1697
  %v1703 = vadd.f32 %v27, %v1699
  %v1704 = vtanh.pop %v1702
  %v1705 = vtanh.pop %v1703
  %v1706 = vsub.f32 1.0, %v1683
  %v1707 = vsub.f32 1.0, %v1685
  %1710 = vrot.lane.b32.xlu0 %v1704, 96
  %v1711 = vpop.permute.xlu0 %1710
  %1712 = vrot.lane.b32.xlu0 %v1705, 96
  %v1713 = vpop.permute.xlu0 %1712
  %v1716 = vmul.f32 %v1706, %v1711
  %v1717 = vmul.f32 %v1707, %v1713
  %v1720 = vrot.slane %v1483, 1
  %v1721 = vrot.slane %v1484, 1
  %v1724 = vmul.f32 %v1683, %v1720
  %v1725 = vmul.f32 %v1685, %v1721
  %v1726 = vadd.f32 %v1716, %v1724
  %v1727 = vadd.f32 %v1717, %v1725
  %1730 = vrot.lane.b32.xlu0 %v1611, 96
  %v1731 = vpop.permute.xlu0 %1730
  %1732 = vrot.lane.b32.xlu0 %v1612, 96
  %v1733 = vpop.permute.xlu0 %1732
  %vm1736 = vcmask 260102
  %1737 = vst.msk [vmem:[%s6] sm:$0x40] %vm1736, %v1731
  %1738 = vst.msk [vmem:[%s6 + $0x8] sm:$0x40] %vm1736, %v1733
  %vm1739 = vcmask 517377
  %1740 = vst.msk [vmem:[%s6] sm:$0x2] %vm1739, %v1726
  %1741 = vst.msk [vmem:[%s6 + $0x8] sm:$0x2] %vm1739, %v1727
  %v1742 = vpack.c.bf16 %v1611, %v1611
  %v1743 = vpack.c.bf16 %v1612, %v1612
  %v1746 = vunpack.c.l.b16 %v1742
  %v1747 = vunpack.c.l.b16 %v1743
  %v1748 = vrot.slane %v1746, 6
  %v1749 = vrot.slane %v1747, 5
  %v1750 = vsel %vm288, %v1749, %v1748
  %v1751 = vpack.c.b16 %v1750, %v1750
  %1752 = vrot.lane.b32.xlu0 %v1751, 96
  %v1753 = vpop.permute.xlu0 %1752
  %v1755 = vsel %vm56, %v1753, 0
  %1757 = vmatprep.subr.bf16.mxu0 0
  %1758 = vmatpush1.bf16.msra.mxu0 %v52
  %1759 = vmatprep.subr.bf16.mxu0 0
  %1760 = vmatpush1.bf16.msra.mxu0 %v53
  %1761 = vmatprep.subr.bf16.mxu0 0
  %1762 = vmatpush1.bf16.msra.mxu0 0
  %1763 = vmatprep.subr.bf16.mxu0 0
  %1764 = vmatpush1.bf16.msra.mxu0 0
  %1765 = vmatprep.subr.bf16.mxu0 0
  %1766 = vmatpush1.bf16.msra.mxu0 0
  %1767 = vmatprep.subr.bf16.mxu0 0
  %1768 = vmatpush1.bf16.msra.mxu0 0
  %1769 = vmatprep.subr.bf16.mxu0 0
  %1770 = vmatpush1.bf16.msra.mxu0 0
  %1771 = vmatprep.subr.bf16.mxu0 0
  %1772 = vmatpush1.bf16.msra.mxu0 0
  %1773 = vmatprep.subr.bf16.mxu0 0
  %1774 = vmatpush1.bf16.msra.mxu0 0
  %1775 = vmatprep.subr.bf16.mxu0 0
  %1776 = vmatpush1.bf16.msra.mxu0 0
  %1777 = vmatprep.subr.bf16.mxu0 0
  %1778 = vmatpush1.bf16.msra.mxu0 0
  %1779 = vmatprep.subr.bf16.mxu0 0
  %1780 = vmatpush1.bf16.msra.mxu0 0
  %1781 = vmatprep.subr.bf16.mxu0 0
  %1782 = vmatpush1.bf16.msra.mxu0 0
  %1783 = vmatprep.subr.bf16.mxu0 0
  %1784 = vmatpush1.bf16.msra.mxu0 0
  %1785 = vmatprep.subr.bf16.mxu0 0
  %1786 = vmatpush1.bf16.msra.mxu0 0
  %1787 = vmatprep.subr.bf16.mxu0 0
  %1788 = vmatpush1.bf16.msra.mxu0 0
  %1789 = vmatprep.mubr.bf16.mxu0 0
  %1790 = vmatmul.mubr.bf16.gmra.mrb[0].mxu0 %v1755
  %v1791 = vpop.f32.mrb[0].mxu0
  %v1792 = vadd.f32 %v42, %v1791
  %v1793 = vpop.f32.mrb[0].mxu0
  %v1794 = vpop.f32.mrb[0].mxu0
  %v1795 = vpop.f32.mrb[0].mxu0
  %1796 = vdwg.mxu0
  %v1798 = vrot.slane %v1792, 1
  %v1799 = vrot.slane %v1792, 2
  %v1802 = vadd.f32 %v24, %v1798
  %v1803 = vadd.f32 %v25, %v1799
  %v1804 = vxor.u32 %v1802, 2147483648
  %v1805 = vxor.u32 %v1803, 2147483648
  %v1806 = vmul.f32 %v1804, 1.442695
  %v1807 = vpow.pop %v1806
  %v1808 = vmul.f32 %v1805, 1.442695
  %v1809 = vpow.pop %v1808
  %v1810 = vadd.f32 %v1807, 1.0
  %v1811 = vadd.f32 %v1809, 1.0
  %v1812 = vrcp.pop %v1810
  %v1813 = vmul.f32 1.0, %v1812
  %v1814 = vrcp.pop %v1811
  %v1815 = vmul.f32 1.0, %v1814
  %1816 = vrot.lane.b32.xlu0 %v1798, 64
  %v1817 = vpop.permute.xlu0 %1816
  %1818 = vrot.lane.b32.xlu0 %v1799, 64
  %v1819 = vpop.permute.xlu0 %1818
  %v1822 = vmul.f32 %v1813, %v1817
  %v1823 = vmul.f32 %v1815, %v1819
  %1826 = vrot.lane.b32.xlu0 %v1822, 64
  %v1827 = vpop.permute.xlu0 %1826
  %1828 = vrot.lane.b32.xlu0 %v1823, 64
  %v1829 = vpop.permute.xlu0 %1828
  %v1832 = vadd.f32 %v24, %v1827
  %v1833 = vadd.f32 %v25, %v1829
  %v1834 = vtanh.pop %v1832
  %v1835 = vtanh.pop %v1833
  %v1836 = vsub.f32 1.0, %v1813
  %v1837 = vsub.f32 1.0, %v1815
  %1840 = vrot.lane.b32.xlu0 %v1834, 96
  %v1841 = vpop.permute.xlu0 %1840
  %1842 = vrot.lane.b32.xlu0 %v1835, 96
  %v1843 = vpop.permute.xlu0 %1842
  %v1846 = vmul.f32 %v1836, %v1841
  %v1847 = vmul.f32 %v1837, %v1843
  %v1848 = vrot.slane %v1611, 7
  %v1849 = vrot.slane %v1612, 7
  %v1852 = vmul.f32 %v1813, %v1848
  %v1853 = vmul.f32 %v1815, %v1849
  %v1854 = vadd.f32 %v1846, %v1852
  %v1855 = vadd.f32 %v1847, %v1853
  %v1856 = vpack.c.bf16 %v1726, %v1726
  %v1857 = vpack.c.bf16 %v1727, %v1727
  %v1860 = vunpack.c.l.b16 %v1856
  %v1861 = vunpack.c.l.b16 %v1857
  %v1862 = vrot.slane %v1860, 1
  %v1863 = vsel %vm288, %v1861, %v1862
  %v1864 = vpack.c.b16 %v1863, %v1863
  %1865 = vrot.lane.b32.xlu0 %v1864, 96
  %v1866 = vpop.permute.xlu0 %1865
  %v1868 = vsel %vm56, %v1866, 0
  %1870 = vmatprep.subr.bf16.mxu0 0
  %1871 = vmatpush1.bf16.msra.mxu0 %v168
  %1872 = vmatprep.subr.bf16.mxu0 0
  %1873 = vmatpush1.bf16.msra.mxu0 %v169
  %1874 = vmatprep.subr.bf16.mxu0 0
  %1875 = vmatpush1.bf16.msra.mxu0 0
  %1876 = vmatprep.subr.bf16.mxu0 0
  %1877 = vmatpush1.bf16.msra.mxu0 0
  %1878 = vmatprep.subr.bf16.mxu0 0
  %1879 = vmatpush1.bf16.msra.mxu0 0
  %1880 = vmatprep.subr.bf16.mxu0 0
  %1881 = vmatpush1.bf16.msra.mxu0 0
  %1882 = vmatprep.subr.bf16.mxu0 0
  %1883 = vmatpush1.bf16.msra.mxu0 0
  %1884 = vmatprep.subr.bf16.mxu0 0
  %1885 = vmatpush1.bf16.msra.mxu0 0
  %1886 = vmatprep.subr.bf16.mxu0 0
  %1887 = vmatpush1.bf16.msra.mxu0 0
  %1888 = vmatprep.subr.bf16.mxu0 0
  %1889 = vmatpush1.bf16.msra.mxu0 0
  %1890 = vmatprep.subr.bf16.mxu0 0
  %1891 = vmatpush1.bf16.msra.mxu0 0
  %1892 = vmatprep.subr.bf16.mxu0 0
  %1893 = vmatpush1.bf16.msra.mxu0 0
  %1894 = vmatprep.subr.bf16.mxu0 0
  %1895 = vmatpush1.bf16.msra.mxu0 0
  %1896 = vmatprep.subr.bf16.mxu0 0
  %1897 = vmatpush1.bf16.msra.mxu0 0
  %1898 = vmatprep.subr.bf16.mxu0 0
  %1899 = vmatpush1.bf16.msra.mxu0 0
  %1900 = vmatprep.subr.bf16.mxu0 0
  %1901 = vmatpush1.bf16.msra.mxu0 0
  %1902 = vmatprep.mubr.bf16.mxu0 0
  %1903 = vmatmul.mubr.bf16.gmra.mrb[0].mxu0 %v1868
  %v1904 = vpop.f32.mrb[0].mxu0
  %v1905 = vadd.f32 %v158, %v1904
  %v1906 = vpop.f32.mrb[0].mxu0
  %v1907 = vpop.f32.mrb[0].mxu0
  %v1908 = vpop.f32.mrb[0].mxu0
  %1909 = vdwg.mxu0
  %v1911 = vrot.slane %v1905, 1
  %v1914 = vadd.f32 %v26, %v1905
  %v1915 = vadd.f32 %v27, %v1911
  %v1916 = vxor.u32 %v1914, 2147483648
  %v1917 = vxor.u32 %v1915, 2147483648
  %v1918 = vmul.f32 %v1916, 1.442695
  %v1919 = vpow.pop %v1918
  %v1920 = vmul.f32 %v1917, 1.442695
  %v1921 = vpow.pop %v1920
  %v1922 = vadd.f32 %v1919, 1.0
  %v1923 = vadd.f32 %v1921, 1.0
  %v1924 = vrcp.pop %v1922
  %v1925 = vmul.f32 1.0, %v1924
  %v1926 = vrcp.pop %v1923
  %v1927 = vmul.f32 1.0, %v1926
  %1928 = vrot.lane.b32.xlu0 %v1905, 64
  %v1929 = vpop.permute.xlu0 %1928
  %1930 = vrot.lane.b32.xlu0 %v1911, 64
  %v1931 = vpop.permute.xlu0 %1930
  %v1934 = vmul.f32 %v1925, %v1929
  %v1935 = vmul.f32 %v1927, %v1931
  %1938 = vrot.lane.b32.xlu0 %v1934, 64
  %v1939 = vpop.permute.xlu0 %1938
  %1940 = vrot.lane.b32.xlu0 %v1935, 64
  %v1941 = vpop.permute.xlu0 %1940
  %v1944 = vadd.f32 %v26, %v1939
  %v1945 = vadd.f32 %v27, %v1941
  %v1946 = vtanh.pop %v1944
  %v1947 = vtanh.pop %v1945
  %v1948 = vsub.f32 1.0, %v1925
  %v1949 = vsub.f32 1.0, %v1927
  %1952 = vrot.lane.b32.xlu0 %v1946, 96
  %v1953 = vpop.permute.xlu0 %1952
  %1954 = vrot.lane.b32.xlu0 %v1947, 96
  %v1955 = vpop.permute.xlu0 %1954
  %v1958 = vmul.f32 %v1948, %v1953
  %v1959 = vmul.f32 %v1949, %v1955
  %v1962 = vrot.slane %v1726, 1
  %v1963 = vrot.slane %v1727, 1
  %v1966 = vmul.f32 %v1925, %v1962
  %v1967 = vmul.f32 %v1927, %v1963
  %v1968 = vadd.f32 %v1958, %v1966
  %v1969 = vadd.f32 %v1959, %v1967
  %1972 = vrot.lane.b32.xlu0 %v1854, 96
  %v1973 = vpop.permute.xlu0 %1972
  %1974 = vrot.lane.b32.xlu0 %v1855, 96
  %v1975 = vpop.permute.xlu0 %1974
  %vm1978 = vcmask 261127
  %1979 = vst.msk [vmem:[%s6] sm:$0x80] %vm1978, %v1973
  %1980 = vst.msk [vmem:[%s6 + $0x8] sm:$0x80] %vm1978, %v1975
  %vm1981 = vcmask 516352
  %1982 = vst.msk [vmem:[%s6] sm:$0x1] %vm1981, %v1968
  %1983 = vst.msk [vmem:[%s6 + $0x8] sm:$0x1] %vm1981, %v1969
  // Predicated region
  $region26: #{uni_trans_gru_forward.2} parent=0 // pred_check
    _
  $region27: #{uni_trans_gru_forward.2} parent=0 // pred_check_branch
    %1985 = sbr.rel (0) target = $region29
  $region28: #{uni_trans_gru_forward.2} parent=0 // pred_region
    _
  $region29: #{uni_trans_gru_forward.2} parent=0 // pred_fallthru
    _
  // Predicated region
  $region30: #{uni_trans_gru_forward.2} parent=0 // pred_check
    _
  $region31: #{uni_trans_gru_forward.2} parent=0 // pred_check_branch
    %1987 = sbr.rel (0) target = $region33
  $region32: #{uni_trans_gru_forward.2} parent=0 // pred_region
    _
  $region33: #{uni_trans_gru_forward.2} parent=0 // pred_fallthru
    _

</llo_original>
